<compile_context>
chip_gen: v7x
topology: tpu7x:2x2x1
jax: 0.10.0
libtpu: 0.0.40
codegen_flags: <defaults>
</compile_context>

<pallas_src>
import functools

import jax
import jax.numpy as jnp
from jax.experimental import pallas as pl
from jax.experimental.pallas import tpu as pltpu


def attention_kernel(x_ref, wqkv_ref, pe_ref, wo_ref, bo_ref, o_ref, *,
                     heads, d):
    # x_ref block: (1, N, D) -- one batch element per grid step.
    x = x_ref[0]                                           # (N, D), native dtype
    n = x.shape[0]

    # Fused per-head Q/K/V projection: one batched (H, N, D) x (H, D, 3d)
    # MXU contraction.  The softmax scale is already folded into the Q slice
    # of the weights (wrapper-side), so no per-score scaling is needed.
    xb = jnp.broadcast_to(x, (heads,) + x.shape)           # (H, N, D)
    qkv = jnp.einsum('hnD,hDe->hne', xb, wqkv_ref[...],
                     preferred_element_type=jnp.float32)   # (H, N, 3d) f32
    q = qkv[..., :d]                                       # (H, N, d)
    k = qkv[..., d:2 * d]                                  # (H, N, d)
    v = qkv[..., 2 * d:]                                   # (H, N, d)

    # Scores + additive positional bias (shared across heads).
    pe = pe_ref[:n, :n]                                    # (N, N)
    dots = jnp.einsum('hnd,hmd->hnm', q, k,
                      preferred_element_type=jnp.float32) + pe[None]

    # Numerically-stable softmax along the last axis, kept in f32.
    dots = dots - jnp.max(dots, axis=-1, keepdims=True)
    e = jnp.exp(dots)
    attn = e * pl.reciprocal(jnp.sum(e, axis=-1, keepdims=True), approx=True)

    out = jnp.einsum('hnm,hmd->hnd', attn, v,
                     preferred_element_type=jnp.float32)   # (H, N, d)

    # Output projection without concatenating heads: per-head batched matmul
    # against wo reshaped to (H, d, D), then reduce over the heads axis.
    y = jnp.einsum('hnd,hdD->hnD', out.astype(wo_ref.dtype), wo_ref[...],
                   preferred_element_type=jnp.float32)     # (H, N, D)
    y = jnp.sum(y, axis=0) + bo_ref[...]                   # (N, D)
    o_ref[0] = y.astype(o_ref.dtype)


def attention_forward(x, wq_t, wk_t, wv_t, pe, wo_t, bo, heads):
    """x: (B, N, D). w*_t: (D, D) already transposed to (in, out). bo: (D,)."""
    b, n, dim = x.shape
    assert dim % heads == 0
    d = dim // heads
    # The learned bias pe is (dim, dim) and sliced to (n, n): requires n <= dim
    # (same implicit assumption as the PyTorch module).
    assert n <= pe.shape[0] and n <= pe.shape[1], "pe bias requires n <= dim"
    scale = float(d) ** (-0.5)

    def to_heads(w_t):
        # (D_in, D_out) -> (heads, D_in, d): head h gets output columns
        # [h*d:(h+1)*d].  Pure wrapper-side layout plumbing (XLA, not kernel).
        return w_t.reshape(dim, heads, d).transpose(1, 0, 2)

    # Per-head fused QKV weight, scale folded into the Q part.
    w_qkv = jnp.concatenate(
        [to_heads(wq_t * scale), to_heads(wk_t), to_heads(wv_t)],
        axis=-1)                                           # (heads, D, 3d)
    wo_h = wo_t.reshape(heads, d, dim)                     # (heads, d, D)
    bo2 = bo.reshape(1, dim)

    kernel = functools.partial(attention_kernel, heads=heads, d=d)
    return pl.pallas_call(
        kernel,
        out_shape=jax.ShapeDtypeStruct((b, n, dim), x.dtype),
        grid=(b,),
        in_specs=[
            pl.BlockSpec((1, n, dim), lambda i: (i, 0, 0)),          # x
            pl.BlockSpec((heads, dim, 3 * d), lambda i: (0, 0, 0)),  # fused QKV W
            pl.BlockSpec(pe.shape, lambda i: (0, 0)),                # pe
            pl.BlockSpec((heads, d, dim), lambda i: (0, 0, 0)),      # wo per-head
            pl.BlockSpec((1, dim), lambda i: (0, 0)),                # bo
        ],
        out_specs=pl.BlockSpec((1, n, dim), lambda i: (i, 0, 0)),
        compiler_params=pltpu.CompilerParams(
            dimension_semantics=("parallel",)),
    )(x, w_qkv, pe, wo_h, bo2)


if __name__ == "__main__":
    b, n, dim, heads = 2, 8, 32, 8            # dim_head = 4
    key = jax.random.PRNGKey(0)
    ks = jax.random.split(key, 7)

    x = jax.random.normal(ks[0], (b, n, dim), jnp.float32)
    # torch nn.Linear weights have shape (out, in); deterministic synthetic init
    wq = jax.random.normal(ks[1], (dim, dim), jnp.float32) * 0.1
    wk = jax.random.normal(ks[2], (dim, dim), jnp.float32) * 0.1
    wv = jax.random.normal(ks[3], (dim, dim), jnp.float32) * 0.1
    pe = jax.random.normal(ks[4], (dim, dim), jnp.float32)     # nn.Parameter(randn(dim, dim))
    wo = jax.random.normal(ks[5], (dim, dim), jnp.float32) * 0.1
    bo = jax.random.normal(ks[6], (dim,), jnp.float32) * 0.1

    out = attention_forward(x, wq.T, wk.T, wv.T, pe, wo.T, bo, heads)
    out = jax.block_until_ready(out)

    # pure-JAX reference (mirrors the PyTorch forward exactly)
    def reference(x):
        d = dim // heads
        q = x @ wq.T
        k = x @ wk.T
        v = x @ wv.T
        qh = q.reshape(b, n, heads, d).transpose(0, 2, 1, 3)
        kh = k.reshape(b, n, heads, d).transpose(0, 2, 1, 3)
        vh = v.reshape(b, n, heads, d).transpose(0, 2, 1, 3)
        dots = jnp.einsum('bhid,bhjd->bhij', qh, kh) * (d ** -0.5)
        dots = dots + pe[:n, :n]
        attn = jax.nn.softmax(dots, axis=-1)
        o = jnp.einsum('bhij,bhjd->bhid', attn, vh)
        o = o.transpose(0, 2, 1, 3).reshape(b, n, dim)
        return o @ wo.T + bo                  # Dropout(0.0) == identity

    ref = reference(x)
    assert out.shape == (b, n, dim)
    assert jnp.allclose(out, ref, atol=2e-3, rtol=2e-3)
    print("KERNEL_OK")
</pallas_src>

<mosaic_0001>
module attributes {stable_mosaic.version = 11 : i64} {
  func.func @attention_kernel(%arg0: i32, %arg1: memref<1x8x32xf32, #tpu.memory_space<vmem>>, %arg2: memref<8x32x12xf32, #tpu.memory_space<vmem>>, %arg3: memref<32x32xf32, #tpu.memory_space<vmem>>, %arg4: memref<8x4x32xf32, #tpu.memory_space<vmem>>, %arg5: memref<1x32xf32, #tpu.memory_space<vmem>>, %arg6: memref<1x8x32xf32, #tpu.memory_space<vmem>>) attributes {dimension_semantics = [#tpu.dimension_semantics<parallel>], iteration_bounds = array<i64: 2>, scalar_prefetch = 0 : i64, scratch_operands = 0 : i64, tpu.core_type = #tpu.core_type<tc>, window_params = [{transform_indices = @transform_0, window_bounds = array<i64: 1, 8, 32>}, {pipeline_mode = #tpu.pipeline_mode<synchronous>, transform_indices = @transform_1, window_bounds = array<i64: 8, 32, 12>}, {pipeline_mode = #tpu.pipeline_mode<synchronous>, transform_indices = @transform_2, window_bounds = array<i64: 32, 32>}, {pipeline_mode = #tpu.pipeline_mode<synchronous>, transform_indices = @transform_3, window_bounds = array<i64: 8, 4, 32>}, {pipeline_mode = #tpu.pipeline_mode<synchronous>, transform_indices = @transform_4, window_bounds = array<i64: 1, 32>}, {transform_indices = @transform_5, window_bounds = array<i64: 1, 8, 32>}]} {
    %c0 = arith.constant 0 : index
    %c0_0 = arith.constant 0 : index
    %c0_1 = arith.constant 0 : index
    %0 = vector.load %arg1[%c0, %c0_0, %c0_1] : memref<1x8x32xf32, #tpu.memory_space<vmem>>, vector<1x8x32xf32>
    %1 = vector.shape_cast %0 : vector<1x8x32xf32> to vector<8x32xf32>
    %2 = vector.shape_cast %1 : vector<8x32xf32> to vector<1x8x32xf32>
    %3 = vector.broadcast %2 : vector<1x8x32xf32> to vector<8x8x32xf32>
    %c0_2 = arith.constant 0 : index
    %c0_3 = arith.constant 0 : index
    %c0_4 = arith.constant 0 : index
    %4 = vector.load %arg2[%c0_2, %c0_3, %c0_4] : memref<8x32x12xf32, #tpu.memory_space<vmem>>, vector<8x32x12xf32>
    "tpu.trace_start"() <{level = 10 : i32, message = "hnD,hDe->hne"}> : () -> ()
    %cst = arith.constant dense<0.000000e+00> : vector<8x8x12xf32>
    %5 = tpu.matmul %3, %4, %cst {dimension_numbers = #tpu.dot_dimension_numbers<[2], [1], [1], [2], [0, 0, 0, 1, 1, 2], [0], [0]>} : vector<8x8x32xf32>, vector<8x32x12xf32>, vector<8x8x12xf32> -> vector<8x8x12xf32>
    "tpu.trace_stop"() : () -> ()
    %6 = vector.extract_strided_slice %5 {offsets = [0, 0, 0], sizes = [8, 8, 4], strides = [1, 1, 1]} : vector<8x8x12xf32> to vector<8x8x4xf32>
    %7 = vector.extract_strided_slice %5 {offsets = [0, 0, 4], sizes = [8, 8, 4], strides = [1, 1, 1]} : vector<8x8x12xf32> to vector<8x8x4xf32>
    %8 = vector.extract_strided_slice %5 {offsets = [0, 0, 8], sizes = [8, 8, 4], strides = [1, 1, 1]} : vector<8x8x12xf32> to vector<8x8x4xf32>
    %c0_5 = arith.constant 0 : index
    %c0_6 = arith.constant 0 : index
    %9 = vector.load %arg3[%c0_5, %c0_6] : memref<32x32xf32, #tpu.memory_space<vmem>>, vector<8x8xf32>
    "tpu.trace_start"() <{level = 10 : i32, message = "hnd,hmd->hnm"}> : () -> ()
    %cst_7 = arith.constant dense<0.000000e+00> : vector<8x8x8xf32>
    %10 = tpu.matmul %6, %7, %cst_7 {dimension_numbers = #tpu.dot_dimension_numbers<[2], [2], [1], [1], [0, 0, 0, 1, 1, 1], [0], [0]>} : vector<8x8x4xf32>, vector<8x8x4xf32>, vector<8x8x8xf32> -> vector<8x8x8xf32>
    "tpu.trace_stop"() : () -> ()
    %11 = vector.shape_cast %9 : vector<8x8xf32> to vector<1x8x8xf32>
    %12 = vector.broadcast %11 : vector<1x8x8xf32> to vector<8x8x8xf32>
    %13 = arith.addf %10, %12 : vector<8x8x8xf32>
    %cst_8 = arith.constant dense<0xFF800000> : vector<8x8xf32>
    %14 = vector.multi_reduction <maximumf>, %13, %cst_8 [2] : vector<8x8x8xf32> to vector<8x8xf32>
    %15 = vector.shape_cast %14 : vector<8x8xf32> to vector<8x8x1xf32>
    %16 = vector.broadcast %15 : vector<8x8x1xf32> to vector<8x8x8xf32>
    %17 = arith.subf %13, %16 : vector<8x8x8xf32>
    %18 = math.exp %17 : vector<8x8x8xf32>
    %cst_9 = arith.constant dense<0.000000e+00> : vector<8x8xf32>
    %19 = vector.multi_reduction <add>, %18, %cst_9 [2] : vector<8x8x8xf32> to vector<8x8xf32>
    %20 = vector.shape_cast %19 : vector<8x8xf32> to vector<8x8x1xf32>
    %21 = tpu.reciprocal %20 {approx = true} : vector<8x8x1xf32> -> vector<8x8x1xf32>
    %22 = vector.broadcast %21 : vector<8x8x1xf32> to vector<8x8x8xf32>
    %23 = arith.mulf %18, %22 : vector<8x8x8xf32>
    "tpu.trace_start"() <{level = 10 : i32, message = "hnm,hmd->hnd"}> : () -> ()
    %cst_10 = arith.constant dense<0.000000e+00> : vector<8x8x4xf32>
    %24 = tpu.matmul %23, %8, %cst_10 {dimension_numbers = #tpu.dot_dimension_numbers<[2], [1], [1], [2], [0, 0, 0, 1, 1, 2], [0], [0]>} : vector<8x8x8xf32>, vector<8x8x4xf32>, vector<8x8x4xf32> -> vector<8x8x4xf32>
    "tpu.trace_stop"() : () -> ()
    %c0_11 = arith.constant 0 : index
    %c0_12 = arith.constant 0 : index
    %c0_13 = arith.constant 0 : index
    %25 = vector.load %arg4[%c0_11, %c0_12, %c0_13] : memref<8x4x32xf32, #tpu.memory_space<vmem>>, vector<8x4x32xf32>
    "tpu.trace_start"() <{level = 10 : i32, message = "hnd,hdD->hnD"}> : () -> ()
    %cst_14 = arith.constant dense<0.000000e+00> : vector<8x8x32xf32>
    %26 = tpu.matmul %24, %25, %cst_14 {dimension_numbers = #tpu.dot_dimension_numbers<[2], [1], [1], [2], [0, 0, 0, 1, 1, 2], [0], [0]>} : vector<8x8x4xf32>, vector<8x4x32xf32>, vector<8x8x32xf32> -> vector<8x8x32xf32>
    "tpu.trace_stop"() : () -> ()
    %cst_15 = arith.constant dense<0.000000e+00> : vector<8x32xf32>
    %27 = vector.multi_reduction <add>, %26, %cst_15 [0] : vector<8x8x32xf32> to vector<8x32xf32>
    %c0_16 = arith.constant 0 : index
    %c0_17 = arith.constant 0 : index
    %28 = vector.load %arg5[%c0_16, %c0_17] : memref<1x32xf32, #tpu.memory_space<vmem>>, vector<1x32xf32>
    %29 = vector.broadcast %28 : vector<1x32xf32> to vector<8x32xf32>
    %30 = arith.addf %27, %29 : vector<8x32xf32>
    %c0_18 = arith.constant 0 : index
    %c0_19 = arith.constant 0 : index
    %c0_20 = arith.constant 0 : index
    %31 = vector.load %arg6[%c0_18, %c0_19, %c0_20] : memref<1x8x32xf32, #tpu.memory_space<vmem>>, vector<1x8x32xf32>
    %32 = vector.shape_cast %31 : vector<1x8x32xf32> to vector<8x32xf32>
    %33 = vector.shape_cast %30 : vector<8x32xf32> to vector<1x8x32xf32>
    tpu.vector_store %arg6[%c0_18, %c0_19, %c0_20], %33 {strides = array<i32>} : memref<1x8x32xf32, #tpu.memory_space<vmem>>, vector<1x8x32xf32>,
    return
  }
  func.func @transform_0(%arg0: i32) -> (i32, i32, i32) {
    %c0_i32 = arith.constant 0 : i32
    %c0_i32_0 = arith.constant 0 : i32
    %c0_i32_1 = arith.constant 0 : i32
    return %arg0, %c0_i32, %c0_i32_0 : i32, i32, i32
  }
  func.func @transform_1(%arg0: i32) -> (i32, i32, i32) {
    %c0_i32 = arith.constant 0 : i32
    %c0_i32_0 = arith.constant 0 : i32
    %c0_i32_1 = arith.constant 0 : i32
    %c0_i32_2 = arith.constant 0 : i32
    return %c0_i32, %c0_i32_0, %c0_i32_1 : i32, i32, i32
  }
  func.func @transform_2(%arg0: i32) -> (i32, i32) {
    %c0_i32 = arith.constant 0 : i32
    %c0_i32_0 = arith.constant 0 : i32
    %c0_i32_1 = arith.constant 0 : i32
    return %c0_i32, %c0_i32_0 : i32, i32
  }
  func.func @transform_3(%arg0: i32) -> (i32, i32, i32) {
    %c0_i32 = arith.constant 0 : i32
    %c0_i32_0 = arith.constant 0 : i32
    %c0_i32_1 = arith.constant 0 : i32
    %c0_i32_2 = arith.constant 0 : i32
    return %c0_i32, %c0_i32_0, %c0_i32_1 : i32, i32, i32
  }
  func.func @transform_4(%arg0: i32) -> (i32, i32) {
    %c0_i32 = arith.constant 0 : i32
    %c0_i32_0 = arith.constant 0 : i32
    %c0_i32_1 = arith.constant 0 : i32
    return %c0_i32, %c0_i32_0 : i32, i32
  }
  func.func @transform_5(%arg0: i32) -> (i32, i32, i32) {
    %c0_i32 = arith.constant 0 : i32
    %c0_i32_0 = arith.constant 0 : i32
    %c0_i32_1 = arith.constant 0 : i32
    return %arg0, %c0_i32, %c0_i32_0 : i32, i32, i32
  }
}

</mosaic_0001>

<llo_original>
// kernel: tpu_custom_call.1
$region0: #{tpu_custom_call.1}
  #allocation0 [shape = 'u32[]', space=smem, size = 0x4, offset = 0x4, fixed_abs, tag = 'smem constant byte address 0x4 - core index']
  #allocation1 [shape = 'u32[144,128]{1,0:T(1,128)}', space=vmem, size = 0x12000, scoped, tag = 'internal scratch']
  %s0 = inlined_call_operand.vmem [shape: f32[2,8,32], index: 0, kind: input, shape index: {}]
  %s1 = inlined_call_operand.vmem [shape: f32[8,32,12], index: 1, kind: input, shape index: {}]
  %s2 = inlined_call_operand.vmem [shape: f32[32,32], index: 2, kind: input, shape index: {}]
  %s3 = inlined_call_operand.vmem [shape: f32[8,4,32], index: 3, kind: input, shape index: {}]
  %s4 = inlined_call_operand.vmem [shape: f32[1,32], index: 4, kind: input, shape index: {}]
  %s5 = inlined_call_operand.hbm [shape: f32[2,8,32], index: 5, kind: output, shape index: {}]
  %s6 = sld [smem:[#allocation0]]
  $region53: #{tpu_custom_call.1} parent=0
    _
  %s8 = ssub.s32 1, %s6
  %s9 = scalar_select 0, %s8, %s6
  $region1: #{tpu_custom_call.1} parent=0
    #allocation2 [shape = 'u8[8192]{0}', space=vmem, size = 0x2000, scoped, tag = 'output window, operand 0']
    #allocation3 [shape = 's32[2]{0}', space=sflag, size = 0x8, scoped, tag = 'scoped memory for tpu_custom_call.1']
    %10 = vsyncpa [#allocation3], 0
    %s11 = scalar_lea.sflag [#allocation3], 1
    %12 = vsyncpa %s11, 0
    loop: start=0, step=1, limit=4
    $region2: #{tpu_custom_call.1} parent=1 // loop_pre_header
      _
    $region3: #{tpu_custom_call.1} parent=1 // loop_header
      %s14 = sphi 0, %s18
      %p15 = scmp.ge.s32.totalorder %s14, 4
      %s24 = sphi 0, %s26
      %s27 = sphi 0, %s24
      %s28 = sphi 0, %s27
      %s44 = sphi 0, %s28
      %s48 = sphi 0, %s48
      %s50 = sphi 0, %s48
      %s51 = sphi 0, %s50
      %s65 = sphi 0, %s51
      %s69 = sphi 0, %s69
      %s71 = sphi 0, %s69
      %s72 = sphi 0, %s71
      %s86 = sphi 0, %s72
      %s90 = sphi 0, %s90
      %s92 = sphi 0, %s90
      %s93 = sphi 0, %s92
      %s107 = sphi 0, %s93
      %s111 = sphi 0, %s111
      %s113 = sphi 0, %s111
      %s114 = sphi 0, %s113
      %s128 = sphi 0, %s114
      %s134 = sphi 0, %s136
      %s137 = sphi 0, %s134
      %s138 = sphi 0, %s137
      %s154 = sphi 0, %s138
    $region4: #{tpu_custom_call.1} parent=1 // loop_header_branch
      %17 = sbr.rel (%p15) target = $region8
    $region5: #{tpu_custom_call.1} parent=1 // loop_body
      %s19 = ssub.s32 %s14, 1
      %s20 = ssub.s32 %s14, 2
      %s21 = sadd.s32 %s14, 1
      %s22 = ssub.s32 %s14, %s21
      %p23 = scmp.eq.s32.totalorder %s22, 0
      %s25 = sadd.s32 %s24, 1
      %s26 = scalar_select %p23, %s24, %s25
      %p29 = pneg %p23
      %p30 = scmp.eq.s32.totalorder %s14, 1
      %p31 = por %p29, %p30
      %p32 = scmp.ne.s32.totalorder %s24, %s27
      %p33 = scmp.eq.s32.totalorder %s14, 0
      %p34 = por %p32, %p33
      %p35 = scmp.ne.s32.totalorder %s24, %s27
      %p36 = scmp.eq.s32.totalorder %s19, 1
      %p37 = por %p35, %p36
      %p38 = scmp.ne.s32.totalorder %s27, %s28
      %p39 = scmp.eq.s32.totalorder %s19, 0
      %p40 = por %p38, %p39
      %p41 = scmp.ne.s32.totalorder %s27, %s28
      %p42 = scmp.eq.s32.totalorder %s20, 1
      %p43 = por %p41, %p42
      %p45 = scmp.ne.s32.totalorder %s28, %s44
      %p46 = scmp.eq.s32.totalorder %s20, 0
      %p47 = por %p45, %p46
      %s49 = sadd.s32 %s48, 1
      %p52 = scmp.eq.s32.totalorder %s14, 1
      %p53 = scmp.ne.s32.totalorder %s48, %s50
      %p54 = scmp.eq.s32.totalorder %s14, 0
      %p55 = por %p53, %p54
      %p56 = scmp.ne.s32.totalorder %s48, %s50
      %p57 = scmp.eq.s32.totalorder %s19, 1
      %p58 = por %p56, %p57
      %p59 = scmp.ne.s32.totalorder %s50, %s51
      %p60 = scmp.eq.s32.totalorder %s19, 0
      %p61 = por %p59, %p60
      %p62 = scmp.ne.s32.totalorder %s50, %s51
      %p63 = scmp.eq.s32.totalorder %s20, 1
      %p64 = por %p62, %p63
      %p66 = scmp.ne.s32.totalorder %s51, %s65
      %p67 = scmp.eq.s32.totalorder %s20, 0
      %p68 = por %p66, %p67
      %s70 = sadd.s32 %s69, 1
      %p73 = scmp.eq.s32.totalorder %s14, 1
      %p74 = scmp.ne.s32.totalorder %s69, %s71
      %p75 = scmp.eq.s32.totalorder %s14, 0
      %p76 = por %p74, %p75
      %p77 = scmp.ne.s32.totalorder %s69, %s71
      %p78 = scmp.eq.s32.totalorder %s19, 1
      %p79 = por %p77, %p78
      %p80 = scmp.ne.s32.totalorder %s71, %s72
      %p81 = scmp.eq.s32.totalorder %s19, 0
      %p82 = por %p80, %p81
      %p83 = scmp.ne.s32.totalorder %s71, %s72
      %p84 = scmp.eq.s32.totalorder %s20, 1
      %p85 = por %p83, %p84
      %p87 = scmp.ne.s32.totalorder %s72, %s86
      %p88 = scmp.eq.s32.totalorder %s20, 0
      %p89 = por %p87, %p88
      %s91 = sadd.s32 %s90, 1
      %p94 = scmp.eq.s32.totalorder %s14, 1
      %p95 = scmp.ne.s32.totalorder %s90, %s92
      %p96 = scmp.eq.s32.totalorder %s14, 0
      %p97 = por %p95, %p96
      %p98 = scmp.ne.s32.totalorder %s90, %s92
      %p99 = scmp.eq.s32.totalorder %s19, 1
      %p100 = por %p98, %p99
      %p101 = scmp.ne.s32.totalorder %s92, %s93
      %p102 = scmp.eq.s32.totalorder %s19, 0
      %p103 = por %p101, %p102
      %p104 = scmp.ne.s32.totalorder %s92, %s93
      %p105 = scmp.eq.s32.totalorder %s20, 1
      %p106 = por %p104, %p105
      %p108 = scmp.ne.s32.totalorder %s93, %s107
      %p109 = scmp.eq.s32.totalorder %s20, 0
      %p110 = por %p108, %p109
      %s112 = sadd.s32 %s111, 1
      %p115 = scmp.eq.s32.totalorder %s14, 1
      %p116 = scmp.ne.s32.totalorder %s111, %s113
      %p117 = scmp.eq.s32.totalorder %s14, 0
      %p118 = por %p116, %p117
      %p119 = scmp.ne.s32.totalorder %s111, %s113
      %p120 = scmp.eq.s32.totalorder %s19, 1
      %p121 = por %p119, %p120
      %p122 = scmp.ne.s32.totalorder %s113, %s114
      %p123 = scmp.eq.s32.totalorder %s19, 0
      %p124 = por %p122, %p123
      %p125 = scmp.ne.s32.totalorder %s113, %s114
      %p126 = scmp.eq.s32.totalorder %s20, 1
      %p127 = por %p125, %p126
      %p129 = scmp.ne.s32.totalorder %s114, %s128
      %p130 = scmp.eq.s32.totalorder %s20, 0
      %p131 = por %p129, %p130
      %s132 = ssub.s32 %s14, %s21
      %p133 = scmp.eq.s32.totalorder %s132, 0
      %s135 = sadd.s32 %s134, 1
      %s136 = scalar_select %p133, %s134, %s135
      %p139 = pneg %p133
      %p140 = scmp.eq.s32.totalorder %s14, 1
      %p141 = por %p139, %p140
      %p142 = scmp.ne.s32.totalorder %s134, %s137
      %p143 = scmp.eq.s32.totalorder %s14, 0
      %p144 = por %p142, %p143
      %p145 = scmp.ne.s32.totalorder %s134, %s137
      %p146 = scmp.eq.s32.totalorder %s19, 1
      %p147 = por %p145, %p146
      %p148 = scmp.ne.s32.totalorder %s137, %s138
      %p149 = scmp.eq.s32.totalorder %s19, 0
      %p150 = por %p148, %p149
      %p151 = scmp.ne.s32.totalorder %s137, %s138
      %p152 = scmp.eq.s32.totalorder %s20, 1
      %p153 = por %p151, %p152
      %p155 = scmp.ne.s32.totalorder %s138, %s154
      %p156 = scmp.eq.s32.totalorder %s20, 0
      %p157 = por %p155, %p156
      %p158 = scmp.le.s32.totalorder 1, %s14
      %p159 = scmp.lt.s32.totalorder %s14, 3
      %p160 = pnand %p158, %p159
      %p161 = pneg %p160
      // Predicated region
      $region9: #{tpu_custom_call.1} parent=5 // pred_check
        _
      $region10: #{tpu_custom_call.1} parent=5 // pred_check_branch
        %163 = sbr.rel (%p160) target = $region12
      $region11: #{tpu_custom_call.1} parent=5 // pred_region
        %s164 = ssub.s32 %s14, 1
        // Predicated region
        $region13: #{tpu_custom_call.1} parent=11 // pred_check
          %p165 = pneg %p61
        $region14: #{tpu_custom_call.1} parent=11 // pred_check_branch
          %167 = sbr.rel (%p165) target = $region16
        $region15: #{tpu_custom_call.1} parent=11 // pred_region
          _
        $region16: #{tpu_custom_call.1} parent=11 // pred_fallthru
          _
        // Predicated region
        $region17: #{tpu_custom_call.1} parent=11 // pred_check
          %p168 = pneg %p82
        $region18: #{tpu_custom_call.1} parent=11 // pred_check_branch
          %170 = sbr.rel (%p168) target = $region20
        $region19: #{tpu_custom_call.1} parent=11 // pred_region
          _
        $region20: #{tpu_custom_call.1} parent=11 // pred_fallthru
          _
        // Predicated region
        $region21: #{tpu_custom_call.1} parent=11 // pred_check
          %p171 = pneg %p103
        $region22: #{tpu_custom_call.1} parent=11 // pred_check_branch
          %173 = sbr.rel (%p171) target = $region24
        $region23: #{tpu_custom_call.1} parent=11 // pred_region
          _
        $region24: #{tpu_custom_call.1} parent=11 // pred_fallthru
          _
        // Predicated region
        $region25: #{tpu_custom_call.1} parent=11 // pred_check
          %p174 = pneg %p124
        $region26: #{tpu_custom_call.1} parent=11 // pred_check_branch
          %176 = sbr.rel (%p174) target = $region28
        $region27: #{tpu_custom_call.1} parent=11 // pred_region
          _
        $region28: #{tpu_custom_call.1} parent=11 // pred_fallthru
          _
      $region12: #{tpu_custom_call.1} parent=5 // pred_fallthru
        _
      %p177 = scmp.lt.s32.totalorder %s14, 2
      // Predicated region
      $region29: #{tpu_custom_call.1} parent=5 // pred_check
        %p178 = pneg %p177
      $region30: #{tpu_custom_call.1} parent=5 // pred_check_branch
        %180 = sbr.rel (%p178) target = $region32
      $region31: #{tpu_custom_call.1} parent=5 // pred_region
        // Predicated region
        $region33: #{tpu_custom_call.1} parent=31 // pred_check
          %p181 = pneg %p34
        $region34: #{tpu_custom_call.1} parent=31 // pred_check_branch
          %183 = sbr.rel (%p181) target = $region36
        $region35: #{tpu_custom_call.1} parent=31 // pred_region
          %p184 = scmp.lt.s32.totalorder %s14, 1
          %s185 = scalar_select %p184, %s14, 1
          %s186 = smul.addr %s185, 8
          %s187 = scalar_lea.vmem %s0, %s186
        $region36: #{tpu_custom_call.1} parent=31 // pred_fallthru
          _
      $region32: #{tpu_custom_call.1} parent=5 // pred_fallthru
        _
      %p188 = scmp.le.s32.totalorder 1, %s14
      %p189 = scmp.lt.s32.totalorder %s14, 3
      %p190 = pnand %p188, %p189
      %p191 = pneg %p190
      // Predicated region
      $region37: #{tpu_custom_call.1} parent=5 // pred_check
        _
      $region38: #{tpu_custom_call.1} parent=5 // pred_check_branch
        %193 = sbr.rel (%p190) target = $region40
      $region39: #{tpu_custom_call.1} parent=5 // pred_region
        %s194 = ssub.s32 %s14, 1
        %p195 = scmp.lt.s32.totalorder %s19, 1
        %s196 = scalar_select %p195, %s19, 1
        %s197 = smul.addr %s196, 8
        %s198 = scalar_lea.vmem %s0, %s197
        %p199 = pneg %p40
        %p200 = pneg %p37
        %p201 = pneg %p61
        %p202 = pneg %p58
        %p203 = pneg %p82
        %p204 = pneg %p79
        %p205 = pneg %p103
        %p206 = pneg %p100
        %p207 = pneg %p124
        %p208 = pneg %p121
        %p209 = pneg %p150
        %p210 = pneg %p147
        %s211 = sand.u32 %s137, 1
        %s212 = scalar_lea.sflag [#allocation3], %s211
        %s213 = sand.u32 %s137, 1
        %s214 = smul.addr %s213, 8
        %s215 = scalar_lea.vmem [#allocation2], %s214
        %p216 = scmp.lt.s32.totalorder %s19, 1
        %s217 = scalar_select %p216, %s19, 1
        %s218 = smul.addr %s217, 8
        %s219 = scalar_lea.vmem %s0, %s218
        %v220 = vld [vmem:[%s219] sm:$0xff]
        %v221 = vld [vmem:[%s1] sm:$0xff]
        %v222 = vld [vmem:[%s1 + $0x8] sm:$0xff]
        %v223 = vld [vmem:[%s1 + $0x10] sm:$0xff]
        %v224 = vld [vmem:[%s1 + $0x18] sm:$0xff]
        %v225 = vld [vmem:[%s1 + $0x20] sm:$0xff]
        %v226 = vld [vmem:[%s1 + $0x28] sm:$0xff]
        %v227 = vld [vmem:[%s1 + $0x30] sm:$0xff]
        %v228 = vld [vmem:[%s1 + $0x38] sm:$0xff]
        %v229 = vld [vmem:[%s1 + $0x40] sm:$0xff]
        %v230 = vld [vmem:[%s1 + $0x48] sm:$0xff]
        %v231 = vld [vmem:[%s1 + $0x50] sm:$0xff]
        %v232 = vld [vmem:[%s1 + $0x58] sm:$0xff]
        %v233 = vld [vmem:[%s1 + $0x60] sm:$0xff]
        %v234 = vld [vmem:[%s1 + $0x68] sm:$0xff]
        %v235 = vld [vmem:[%s1 + $0x70] sm:$0xff]
        %v236 = vld [vmem:[%s1 + $0x78] sm:$0xff]
        %v237 = vld [vmem:[%s1 + $0x80] sm:$0xff]
        %v238 = vld [vmem:[%s1 + $0x88] sm:$0xff]
        %v239 = vld [vmem:[%s1 + $0x90] sm:$0xff]
        %v240 = vld [vmem:[%s1 + $0x98] sm:$0xff]
        %v241 = vld [vmem:[%s1 + $0xa0] sm:$0xff]
        %v242 = vld [vmem:[%s1 + $0xa8] sm:$0xff]
        %v243 = vld [vmem:[%s1 + $0xb0] sm:$0xff]
        %v244 = vld [vmem:[%s1 + $0xb8] sm:$0xff]
        %v245 = vld [vmem:[%s1 + $0xc0] sm:$0xff]
        %v246 = vld [vmem:[%s1 + $0xc8] sm:$0xff]
        %v247 = vld [vmem:[%s1 + $0xd0] sm:$0xff]
        %v248 = vld [vmem:[%s1 + $0xd8] sm:$0xff]
        %v249 = vld [vmem:[%s1 + $0xe0] sm:$0xff]
        %v250 = vld [vmem:[%s1 + $0xe8] sm:$0xff]
        %v251 = vld [vmem:[%s1 + $0xf0] sm:$0xff]
        %v252 = vld [vmem:[%s1 + $0xf8] sm:$0xff]
        %vm253 = vcmask 261120
        %v255 = vsel %vm253, %v220, 0
        %257 = vmatprep.subr.mxu0 0.0
        %258 = vmatpush1.msra.mxu0 %v221
        %259 = vmatprep.subr.mxu0 0.0
        %260 = vmatpush1.msra.mxu0 %v222
        %261 = vmatprep.subr.mxu0 0.0
        %262 = vmatpush1.msra.mxu0 %v223
        %263 = vmatprep.subr.mxu0 0.0
        %264 = vmatpush1.msra.mxu0 %v224
        %265 = vmatprep.subr.mxu0 0.0
        %266 = vmatpush1.msra.mxu0 0.0
        %267 = vmatprep.subr.mxu0 0.0
        %268 = vmatpush1.msra.mxu0 0.0
        %269 = vmatprep.subr.mxu0 0.0
        %270 = vmatpush1.msra.mxu0 0.0
        %271 = vmatprep.subr.mxu0 0.0
        %272 = vmatpush1.msra.mxu0 0.0
        %273 = vmatprep.subr.mxu0 0.0
        %274 = vmatpush1.msra.mxu0 0.0
        %275 = vmatprep.subr.mxu0 0.0
        %276 = vmatpush1.msra.mxu0 0.0
        %277 = vmatprep.subr.mxu0 0.0
        %278 = vmatpush1.msra.mxu0 0.0
        %279 = vmatprep.subr.mxu0 0.0
        %280 = vmatpush1.msra.mxu0 0.0
        %281 = vmatprep.subr.mxu0 0.0
        %282 = vmatpush1.msra.mxu0 0.0
        %283 = vmatprep.subr.mxu0 0.0
        %284 = vmatpush1.msra.mxu0 0.0
        %285 = vmatprep.subr.mxu0 0.0
        %286 = vmatpush1.msra.mxu0 0.0
        %287 = vmatprep.subr.mxu0 0.0
        %288 = vmatpush1.msra.mxu0 0.0
        %289 = vmatprep.subr.mxu0 0.0
        %290 = vmatpush1.msra.mxu0 0.0
        %291 = vmatprep.subr.mxu0 0.0
        %292 = vmatpush1.msra.mxu0 0.0
        %293 = vmatprep.subr.mxu0 0.0
        %294 = vmatpush1.msra.mxu0 0.0
        %295 = vmatprep.subr.mxu0 0.0
        %296 = vmatpush1.msra.mxu0 0.0
        %297 = vmatprep.subr.mxu0 0.0
        %298 = vmatpush1.msra.mxu0 0.0
        %299 = vmatprep.subr.mxu0 0.0
        %300 = vmatpush1.msra.mxu0 0.0
        %301 = vmatprep.subr.mxu0 0.0
        %302 = vmatpush1.msra.mxu0 0.0
        %303 = vmatprep.subr.mxu0 0.0
        %304 = vmatpush1.msra.mxu0 0.0
        %305 = vmatprep.subr.mxu0 0.0
        %306 = vmatpush1.msra.mxu0 0.0
        %307 = vmatprep.subr.mxu0 0.0
        %308 = vmatpush1.msra.mxu0 0.0
        %309 = vmatprep.subr.mxu0 0.0
        %310 = vmatpush1.msra.mxu0 0.0
        %311 = vmatprep.subr.mxu0 0.0
        %312 = vmatpush1.msra.mxu0 0.0
        %313 = vmatprep.subr.mxu0 0.0
        %314 = vmatpush1.msra.mxu0 0.0
        %315 = vmatprep.subr.mxu0 0.0
        %316 = vmatpush1.msra.mxu0 0.0
        %317 = vmatprep.subr.mxu0 0.0
        %318 = vmatpush1.msra.mxu0 0.0
        %319 = vmatprep.subr.mxu0 0.0
        %320 = vmatpush1.msra.mxu0 0.0
        %321 = vmatprep.mubr.f32.mxu0 0.0
        %322 = vmatmul.mubr.f32.gmra.mrb[0].mxu0 %v255
        %v323 = vpop.f32.mrb[0].mxu0
        %v324 = vadd.f32 0.0, %v323
        %v325 = vpop.f32.mrb[0].mxu0
        %326 = vdwg.mxu0
        %327 = vmatprep.subr.mxu0 0.0
        %328 = vmatpush1.msra.mxu0 %v225
        %329 = vmatprep.subr.mxu0 0.0
        %330 = vmatpush1.msra.mxu0 %v226
        %331 = vmatprep.subr.mxu0 0.0
        %332 = vmatpush1.msra.mxu0 %v227
        %333 = vmatprep.subr.mxu0 0.0
        %334 = vmatpush1.msra.mxu0 %v228
        %335 = vmatprep.subr.mxu0 0.0
        %336 = vmatpush1.msra.mxu0 0.0
        %337 = vmatprep.subr.mxu0 0.0
        %338 = vmatpush1.msra.mxu0 0.0
        %339 = vmatprep.subr.mxu0 0.0
        %340 = vmatpush1.msra.mxu0 0.0
        %341 = vmatprep.subr.mxu0 0.0
        %342 = vmatpush1.msra.mxu0 0.0
        %343 = vmatprep.subr.mxu0 0.0
        %344 = vmatpush1.msra.mxu0 0.0
        %345 = vmatprep.subr.mxu0 0.0
        %346 = vmatpush1.msra.mxu0 0.0
        %347 = vmatprep.subr.mxu0 0.0
        %348 = vmatpush1.msra.mxu0 0.0
        %349 = vmatprep.subr.mxu0 0.0
        %350 = vmatpush1.msra.mxu0 0.0
        %351 = vmatprep.subr.mxu0 0.0
        %352 = vmatpush1.msra.mxu0 0.0
        %353 = vmatprep.subr.mxu0 0.0
        %354 = vmatpush1.msra.mxu0 0.0
        %355 = vmatprep.subr.mxu0 0.0
        %356 = vmatpush1.msra.mxu0 0.0
        %357 = vmatprep.subr.mxu0 0.0
        %358 = vmatpush1.msra.mxu0 0.0
        %359 = vmatprep.subr.mxu0 0.0
        %360 = vmatpush1.msra.mxu0 0.0
        %361 = vmatprep.subr.mxu0 0.0
        %362 = vmatpush1.msra.mxu0 0.0
        %363 = vmatprep.subr.mxu0 0.0
        %364 = vmatpush1.msra.mxu0 0.0
        %365 = vmatprep.subr.mxu0 0.0
        %366 = vmatpush1.msra.mxu0 0.0
        %367 = vmatprep.subr.mxu0 0.0
        %368 = vmatpush1.msra.mxu0 0.0
        %369 = vmatprep.subr.mxu0 0.0
        %370 = vmatpush1.msra.mxu0 0.0
        %371 = vmatprep.subr.mxu0 0.0
        %372 = vmatpush1.msra.mxu0 0.0
        %373 = vmatprep.subr.mxu0 0.0
        %374 = vmatpush1.msra.mxu0 0.0
        %375 = vmatprep.subr.mxu0 0.0
        %376 = vmatpush1.msra.mxu0 0.0
        %377 = vmatprep.subr.mxu0 0.0
        %378 = vmatpush1.msra.mxu0 0.0
        %379 = vmatprep.subr.mxu0 0.0
        %380 = vmatpush1.msra.mxu0 0.0
        %381 = vmatprep.subr.mxu0 0.0
        %382 = vmatpush1.msra.mxu0 0.0
        %383 = vmatprep.subr.mxu0 0.0
        %384 = vmatpush1.msra.mxu0 0.0
        %385 = vmatprep.subr.mxu0 0.0
        %386 = vmatpush1.msra.mxu0 0.0
        %387 = vmatprep.subr.mxu0 0.0
        %388 = vmatpush1.msra.mxu0 0.0
        %389 = vmatprep.subr.mxu0 0.0
        %390 = vmatpush1.msra.mxu0 0.0
        %391 = vmatprep.mubr.f32.mxu0 0.0
        %392 = vmatmul.mubr.f32.gmra.mrb[0].mxu0 %v255
        %v393 = vpop.f32.mrb[0].mxu0
        %v394 = vadd.f32 0.0, %v393
        %v395 = vpop.f32.mrb[0].mxu0
        %396 = vdwg.mxu0
        %397 = vmatprep.subr.mxu0 0.0
        %398 = vmatpush1.msra.mxu0 %v229
        %399 = vmatprep.subr.mxu0 0.0
        %400 = vmatpush1.msra.mxu0 %v230
        %401 = vmatprep.subr.mxu0 0.0
        %402 = vmatpush1.msra.mxu0 %v231
        %403 = vmatprep.subr.mxu0 0.0
        %404 = vmatpush1.msra.mxu0 %v232
        %405 = vmatprep.subr.mxu0 0.0
        %406 = vmatpush1.msra.mxu0 0.0
        %407 = vmatprep.subr.mxu0 0.0
        %408 = vmatpush1.msra.mxu0 0.0
        %409 = vmatprep.subr.mxu0 0.0
        %410 = vmatpush1.msra.mxu0 0.0
        %411 = vmatprep.subr.mxu0 0.0
        %412 = vmatpush1.msra.mxu0 0.0
        %413 = vmatprep.subr.mxu0 0.0
        %414 = vmatpush1.msra.mxu0 0.0
        %415 = vmatprep.subr.mxu0 0.0
        %416 = vmatpush1.msra.mxu0 0.0
        %417 = vmatprep.subr.mxu0 0.0
        %418 = vmatpush1.msra.mxu0 0.0
        %419 = vmatprep.subr.mxu0 0.0
        %420 = vmatpush1.msra.mxu0 0.0
        %421 = vmatprep.subr.mxu0 0.0
        %422 = vmatpush1.msra.mxu0 0.0
        %423 = vmatprep.subr.mxu0 0.0
        %424 = vmatpush1.msra.mxu0 0.0
        %425 = vmatprep.subr.mxu0 0.0
        %426 = vmatpush1.msra.mxu0 0.0
        %427 = vmatprep.subr.mxu0 0.0
        %428 = vmatpush1.msra.mxu0 0.0
        %429 = vmatprep.subr.mxu0 0.0
        %430 = vmatpush1.msra.mxu0 0.0
        %431 = vmatprep.subr.mxu0 0.0
        %432 = vmatpush1.msra.mxu0 0.0
        %433 = vmatprep.subr.mxu0 0.0
        %434 = vmatpush1.msra.mxu0 0.0
        %435 = vmatprep.subr.mxu0 0.0
        %436 = vmatpush1.msra.mxu0 0.0
        %437 = vmatprep.subr.mxu0 0.0
        %438 = vmatpush1.msra.mxu0 0.0
        %439 = vmatprep.subr.mxu0 0.0
        %440 = vmatpush1.msra.mxu0 0.0
        %441 = vmatprep.subr.mxu0 0.0
        %442 = vmatpush1.msra.mxu0 0.0
        %443 = vmatprep.subr.mxu0 0.0
        %444 = vmatpush1.msra.mxu0 0.0
        %445 = vmatprep.subr.mxu0 0.0
        %446 = vmatpush1.msra.mxu0 0.0
        %447 = vmatprep.subr.mxu0 0.0
        %448 = vmatpush1.msra.mxu0 0.0
        %449 = vmatprep.subr.mxu0 0.0
        %450 = vmatpush1.msra.mxu0 0.0
        %451 = vmatprep.subr.mxu0 0.0
        %452 = vmatpush1.msra.mxu0 0.0
        %453 = vmatprep.subr.mxu0 0.0
        %454 = vmatpush1.msra.mxu0 0.0
        %455 = vmatprep.subr.mxu0 0.0
        %456 = vmatpush1.msra.mxu0 0.0
        %457 = vmatprep.subr.mxu0 0.0
        %458 = vmatpush1.msra.mxu0 0.0
        %459 = vmatprep.subr.mxu0 0.0
        %460 = vmatpush1.msra.mxu0 0.0
        %461 = vmatprep.mubr.f32.mxu0 0.0
        %462 = vmatmul.mubr.f32.gmra.mrb[0].mxu0 %v255
        %v463 = vpop.f32.mrb[0].mxu0
        %v464 = vadd.f32 0.0, %v463
        %v465 = vpop.f32.mrb[0].mxu0
        %466 = vdwg.mxu0
        %467 = vmatprep.subr.mxu0 0.0
        %468 = vmatpush1.msra.mxu0 %v233
        %469 = vmatprep.subr.mxu0 0.0
        %470 = vmatpush1.msra.mxu0 %v234
        %471 = vmatprep.subr.mxu0 0.0
        %472 = vmatpush1.msra.mxu0 %v235
        %473 = vmatprep.subr.mxu0 0.0
        %474 = vmatpush1.msra.mxu0 %v236
        %475 = vmatprep.subr.mxu0 0.0
        %476 = vmatpush1.msra.mxu0 0.0
        %477 = vmatprep.subr.mxu0 0.0
        %478 = vmatpush1.msra.mxu0 0.0
        %479 = vmatprep.subr.mxu0 0.0
        %480 = vmatpush1.msra.mxu0 0.0
        %481 = vmatprep.subr.mxu0 0.0
        %482 = vmatpush1.msra.mxu0 0.0
        %483 = vmatprep.subr.mxu0 0.0
        %484 = vmatpush1.msra.mxu0 0.0
        %485 = vmatprep.subr.mxu0 0.0
        %486 = vmatpush1.msra.mxu0 0.0
        %487 = vmatprep.subr.mxu0 0.0
        %488 = vmatpush1.msra.mxu0 0.0
        %489 = vmatprep.subr.mxu0 0.0
        %490 = vmatpush1.msra.mxu0 0.0
        %491 = vmatprep.subr.mxu0 0.0
        %492 = vmatpush1.msra.mxu0 0.0
        %493 = vmatprep.subr.mxu0 0.0
        %494 = vmatpush1.msra.mxu0 0.0
        %495 = vmatprep.subr.mxu0 0.0
        %496 = vmatpush1.msra.mxu0 0.0
        %497 = vmatprep.subr.mxu0 0.0
        %498 = vmatpush1.msra.mxu0 0.0
        %499 = vmatprep.subr.mxu0 0.0
        %500 = vmatpush1.msra.mxu0 0.0
        %501 = vmatprep.subr.mxu0 0.0
        %502 = vmatpush1.msra.mxu0 0.0
        %503 = vmatprep.subr.mxu0 0.0
        %504 = vmatpush1.msra.mxu0 0.0
        %505 = vmatprep.subr.mxu0 0.0
        %506 = vmatpush1.msra.mxu0 0.0
        %507 = vmatprep.subr.mxu0 0.0
        %508 = vmatpush1.msra.mxu0 0.0
        %509 = vmatprep.subr.mxu0 0.0
        %510 = vmatpush1.msra.mxu0 0.0
        %511 = vmatprep.subr.mxu0 0.0
        %512 = vmatpush1.msra.mxu0 0.0
        %513 = vmatprep.subr.mxu0 0.0
        %514 = vmatpush1.msra.mxu0 0.0
        %515 = vmatprep.subr.mxu0 0.0
        %516 = vmatpush1.msra.mxu0 0.0
        %517 = vmatprep.subr.mxu0 0.0
        %518 = vmatpush1.msra.mxu0 0.0
        %519 = vmatprep.subr.mxu0 0.0
        %520 = vmatpush1.msra.mxu0 0.0
        %521 = vmatprep.subr.mxu0 0.0
        %522 = vmatpush1.msra.mxu0 0.0
        %523 = vmatprep.subr.mxu0 0.0
        %524 = vmatpush1.msra.mxu0 0.0
        %525 = vmatprep.subr.mxu0 0.0
        %526 = vmatpush1.msra.mxu0 0.0
        %527 = vmatprep.subr.mxu0 0.0
        %528 = vmatpush1.msra.mxu0 0.0
        %529 = vmatprep.subr.mxu0 0.0
        %530 = vmatpush1.msra.mxu0 0.0
        %531 = vmatprep.mubr.f32.mxu0 0.0
        %532 = vmatmul.mubr.f32.gmra.mrb[0].mxu0 %v255
        %v533 = vpop.f32.mrb[0].mxu0
        %v534 = vadd.f32 0.0, %v533
        %v535 = vpop.f32.mrb[0].mxu0
        %536 = vdwg.mxu0
        %537 = vmatprep.subr.mxu0 0.0
        %538 = vmatpush1.msra.mxu0 %v237
        %539 = vmatprep.subr.mxu0 0.0
        %540 = vmatpush1.msra.mxu0 %v238
        %541 = vmatprep.subr.mxu0 0.0
        %542 = vmatpush1.msra.mxu0 %v239
        %543 = vmatprep.subr.mxu0 0.0
        %544 = vmatpush1.msra.mxu0 %v240
        %545 = vmatprep.subr.mxu0 0.0
        %546 = vmatpush1.msra.mxu0 0.0
        %547 = vmatprep.subr.mxu0 0.0
        %548 = vmatpush1.msra.mxu0 0.0
        %549 = vmatprep.subr.mxu0 0.0
        %550 = vmatpush1.msra.mxu0 0.0
        %551 = vmatprep.subr.mxu0 0.0
        %552 = vmatpush1.msra.mxu0 0.0
        %553 = vmatprep.subr.mxu0 0.0
        %554 = vmatpush1.msra.mxu0 0.0
        %555 = vmatprep.subr.mxu0 0.0
        %556 = vmatpush1.msra.mxu0 0.0
        %557 = vmatprep.subr.mxu0 0.0
        %558 = vmatpush1.msra.mxu0 0.0
        %559 = vmatprep.subr.mxu0 0.0
        %560 = vmatpush1.msra.mxu0 0.0
        %561 = vmatprep.subr.mxu0 0.0
        %562 = vmatpush1.msra.mxu0 0.0
        %563 = vmatprep.subr.mxu0 0.0
        %564 = vmatpush1.msra.mxu0 0.0
        %565 = vmatprep.subr.mxu0 0.0
        %566 = vmatpush1.msra.mxu0 0.0
        %567 = vmatprep.subr.mxu0 0.0
        %568 = vmatpush1.msra.mxu0 0.0
        %569 = vmatprep.subr.mxu0 0.0
        %570 = vmatpush1.msra.mxu0 0.0
        %571 = vmatprep.subr.mxu0 0.0
        %572 = vmatpush1.msra.mxu0 0.0
        %573 = vmatprep.subr.mxu0 0.0
        %574 = vmatpush1.msra.mxu0 0.0
        %575 = vmatprep.subr.mxu0 0.0
        %576 = vmatpush1.msra.mxu0 0.0
        %577 = vmatprep.subr.mxu0 0.0
        %578 = vmatpush1.msra.mxu0 0.0
        %579 = vmatprep.subr.mxu0 0.0
        %580 = vmatpush1.msra.mxu0 0.0
        %581 = vmatprep.subr.mxu0 0.0
        %582 = vmatpush1.msra.mxu0 0.0
        %583 = vmatprep.subr.mxu0 0.0
        %584 = vmatpush1.msra.mxu0 0.0
        %585 = vmatprep.subr.mxu0 0.0
        %586 = vmatpush1.msra.mxu0 0.0
        %587 = vmatprep.subr.mxu0 0.0
        %588 = vmatpush1.msra.mxu0 0.0
        %589 = vmatprep.subr.mxu0 0.0
        %590 = vmatpush1.msra.mxu0 0.0
        %591 = vmatprep.subr.mxu0 0.0
        %592 = vmatpush1.msra.mxu0 0.0
        %593 = vmatprep.subr.mxu0 0.0
        %594 = vmatpush1.msra.mxu0 0.0
        %595 = vmatprep.subr.mxu0 0.0
        %596 = vmatpush1.msra.mxu0 0.0
        %597 = vmatprep.subr.mxu0 0.0
        %598 = vmatpush1.msra.mxu0 0.0
        %599 = vmatprep.subr.mxu0 0.0
        %600 = vmatpush1.msra.mxu0 0.0
        %601 = vmatprep.mubr.f32.mxu0 0.0
        %602 = vmatmul.mubr.f32.gmra.mrb[0].mxu0 %v255
        %v603 = vpop.f32.mrb[0].mxu0
        %v604 = vadd.f32 0.0, %v603
        %v605 = vpop.f32.mrb[0].mxu0
        %606 = vdwg.mxu0
        %607 = vmatprep.subr.mxu0 0.0
        %608 = vmatpush1.msra.mxu0 %v241
        %609 = vmatprep.subr.mxu0 0.0
        %610 = vmatpush1.msra.mxu0 %v242
        %611 = vmatprep.subr.mxu0 0.0
        %612 = vmatpush1.msra.mxu0 %v243
        %613 = vmatprep.subr.mxu0 0.0
        %614 = vmatpush1.msra.mxu0 %v244
        %615 = vmatprep.subr.mxu0 0.0
        %616 = vmatpush1.msra.mxu0 0.0
        %617 = vmatprep.subr.mxu0 0.0
        %618 = vmatpush1.msra.mxu0 0.0
        %619 = vmatprep.subr.mxu0 0.0
        %620 = vmatpush1.msra.mxu0 0.0
        %621 = vmatprep.subr.mxu0 0.0
        %622 = vmatpush1.msra.mxu0 0.0
        %623 = vmatprep.subr.mxu0 0.0
        %624 = vmatpush1.msra.mxu0 0.0
        %625 = vmatprep.subr.mxu0 0.0
        %626 = vmatpush1.msra.mxu0 0.0
        %627 = vmatprep.subr.mxu0 0.0
        %628 = vmatpush1.msra.mxu0 0.0
        %629 = vmatprep.subr.mxu0 0.0
        %630 = vmatpush1.msra.mxu0 0.0
        %631 = vmatprep.subr.mxu0 0.0
        %632 = vmatpush1.msra.mxu0 0.0
        %633 = vmatprep.subr.mxu0 0.0
        %634 = vmatpush1.msra.mxu0 0.0
        %635 = vmatprep.subr.mxu0 0.0
        %636 = vmatpush1.msra.mxu0 0.0
        %637 = vmatprep.subr.mxu0 0.0
        %638 = vmatpush1.msra.mxu0 0.0
        %639 = vmatprep.subr.mxu0 0.0
        %640 = vmatpush1.msra.mxu0 0.0
        %641 = vmatprep.subr.mxu0 0.0
        %642 = vmatpush1.msra.mxu0 0.0
        %643 = vmatprep.subr.mxu0 0.0
        %644 = vmatpush1.msra.mxu0 0.0
        %645 = vmatprep.subr.mxu0 0.0
        %646 = vmatpush1.msra.mxu0 0.0
        %647 = vmatprep.subr.mxu0 0.0
        %648 = vmatpush1.msra.mxu0 0.0
        %649 = vmatprep.subr.mxu0 0.0
        %650 = vmatpush1.msra.mxu0 0.0
        %651 = vmatprep.subr.mxu0 0.0
        %652 = vmatpush1.msra.mxu0 0.0
        %653 = vmatprep.subr.mxu0 0.0
        %654 = vmatpush1.msra.mxu0 0.0
        %655 = vmatprep.subr.mxu0 0.0
        %656 = vmatpush1.msra.mxu0 0.0
        %657 = vmatprep.subr.mxu0 0.0
        %658 = vmatpush1.msra.mxu0 0.0
        %659 = vmatprep.subr.mxu0 0.0
        %660 = vmatpush1.msra.mxu0 0.0
        %661 = vmatprep.subr.mxu0 0.0
        %662 = vmatpush1.msra.mxu0 0.0
        %663 = vmatprep.subr.mxu0 0.0
        %664 = vmatpush1.msra.mxu0 0.0
        %665 = vmatprep.subr.mxu0 0.0
        %666 = vmatpush1.msra.mxu0 0.0
        %667 = vmatprep.subr.mxu0 0.0
        %668 = vmatpush1.msra.mxu0 0.0
        %669 = vmatprep.subr.mxu0 0.0
        %670 = vmatpush1.msra.mxu0 0.0
        %671 = vmatprep.mubr.f32.mxu0 0.0
        %672 = vmatmul.mubr.f32.gmra.mrb[0].mxu0 %v255
        %v673 = vpop.f32.mrb[0].mxu0
        %v674 = vadd.f32 0.0, %v673
        %v675 = vpop.f32.mrb[0].mxu0
        %676 = vdwg.mxu0
        %677 = vmatprep.subr.mxu0 0.0
        %678 = vmatpush1.msra.mxu0 %v245
        %679 = vmatprep.subr.mxu0 0.0
        %680 = vmatpush1.msra.mxu0 %v246
        %681 = vmatprep.subr.mxu0 0.0
        %682 = vmatpush1.msra.mxu0 %v247
        %683 = vmatprep.subr.mxu0 0.0
        %684 = vmatpush1.msra.mxu0 %v248
        %685 = vmatprep.subr.mxu0 0.0
        %686 = vmatpush1.msra.mxu0 0.0
        %687 = vmatprep.subr.mxu0 0.0
        %688 = vmatpush1.msra.mxu0 0.0
        %689 = vmatprep.subr.mxu0 0.0
        %690 = vmatpush1.msra.mxu0 0.0
        %691 = vmatprep.subr.mxu0 0.0
        %692 = vmatpush1.msra.mxu0 0.0
        %693 = vmatprep.subr.mxu0 0.0
        %694 = vmatpush1.msra.mxu0 0.0
        %695 = vmatprep.subr.mxu0 0.0
        %696 = vmatpush1.msra.mxu0 0.0
        %697 = vmatprep.subr.mxu0 0.0
        %698 = vmatpush1.msra.mxu0 0.0
        %699 = vmatprep.subr.mxu0 0.0
        %700 = vmatpush1.msra.mxu0 0.0
        %701 = vmatprep.subr.mxu0 0.0
        %702 = vmatpush1.msra.mxu0 0.0
        %703 = vmatprep.subr.mxu0 0.0
        %704 = vmatpush1.msra.mxu0 0.0
        %705 = vmatprep.subr.mxu0 0.0
        %706 = vmatpush1.msra.mxu0 0.0
        %707 = vmatprep.subr.mxu0 0.0
        %708 = vmatpush1.msra.mxu0 0.0
        %709 = vmatprep.subr.mxu0 0.0
        %710 = vmatpush1.msra.mxu0 0.0
        %711 = vmatprep.subr.mxu0 0.0
        %712 = vmatpush1.msra.mxu0 0.0
        %713 = vmatprep.subr.mxu0 0.0
        %714 = vmatpush1.msra.mxu0 0.0
        %715 = vmatprep.subr.mxu0 0.0
        %716 = vmatpush1.msra.mxu0 0.0
        %717 = vmatprep.subr.mxu0 0.0
        %718 = vmatpush1.msra.mxu0 0.0
        %719 = vmatprep.subr.mxu0 0.0
        %720 = vmatpush1.msra.mxu0 0.0
        %721 = vmatprep.subr.mxu0 0.0
        %722 = vmatpush1.msra.mxu0 0.0
        %723 = vmatprep.subr.mxu0 0.0
        %724 = vmatpush1.msra.mxu0 0.0
        %725 = vmatprep.subr.mxu0 0.0
        %726 = vmatpush1.msra.mxu0 0.0
        %727 = vmatprep.subr.mxu0 0.0
        %728 = vmatpush1.msra.mxu0 0.0
        %729 = vmatprep.subr.mxu0 0.0
        %730 = vmatpush1.msra.mxu0 0.0
        %731 = vmatprep.subr.mxu0 0.0
        %732 = vmatpush1.msra.mxu0 0.0
        %733 = vmatprep.subr.mxu0 0.0
        %734 = vmatpush1.msra.mxu0 0.0
        %735 = vmatprep.subr.mxu0 0.0
        %736 = vmatpush1.msra.mxu0 0.0
        %737 = vmatprep.subr.mxu0 0.0
        %738 = vmatpush1.msra.mxu0 0.0
        %739 = vmatprep.subr.mxu0 0.0
        %740 = vmatpush1.msra.mxu0 0.0
        %741 = vmatprep.mubr.f32.mxu0 0.0
        %742 = vmatmul.mubr.f32.gmra.mrb[0].mxu0 %v255
        %v743 = vpop.f32.mrb[0].mxu0
        %v744 = vadd.f32 0.0, %v743
        %v745 = vpop.f32.mrb[0].mxu0
        %746 = vdwg.mxu0
        %747 = vmatprep.subr.mxu0 0.0
        %748 = vmatpush1.msra.mxu0 %v249
        %749 = vmatprep.subr.mxu0 0.0
        %750 = vmatpush1.msra.mxu0 %v250
        %751 = vmatprep.subr.mxu0 0.0
        %752 = vmatpush1.msra.mxu0 %v251
        %753 = vmatprep.subr.mxu0 0.0
        %754 = vmatpush1.msra.mxu0 %v252
        %755 = vmatprep.subr.mxu0 0.0
        %756 = vmatpush1.msra.mxu0 0.0
        %757 = vmatprep.subr.mxu0 0.0
        %758 = vmatpush1.msra.mxu0 0.0
        %759 = vmatprep.subr.mxu0 0.0
        %760 = vmatpush1.msra.mxu0 0.0
        %761 = vmatprep.subr.mxu0 0.0
        %762 = vmatpush1.msra.mxu0 0.0
        %763 = vmatprep.subr.mxu0 0.0
        %764 = vmatpush1.msra.mxu0 0.0
        %765 = vmatprep.subr.mxu0 0.0
        %766 = vmatpush1.msra.mxu0 0.0
        %767 = vmatprep.subr.mxu0 0.0
        %768 = vmatpush1.msra.mxu0 0.0
        %769 = vmatprep.subr.mxu0 0.0
        %770 = vmatpush1.msra.mxu0 0.0
        %771 = vmatprep.subr.mxu0 0.0
        %772 = vmatpush1.msra.mxu0 0.0
        %773 = vmatprep.subr.mxu0 0.0
        %774 = vmatpush1.msra.mxu0 0.0
        %775 = vmatprep.subr.mxu0 0.0
        %776 = vmatpush1.msra.mxu0 0.0
        %777 = vmatprep.subr.mxu0 0.0
        %778 = vmatpush1.msra.mxu0 0.0
        %779 = vmatprep.subr.mxu0 0.0
        %780 = vmatpush1.msra.mxu0 0.0
        %781 = vmatprep.subr.mxu0 0.0
        %782 = vmatpush1.msra.mxu0 0.0
        %783 = vmatprep.subr.mxu0 0.0
        %784 = vmatpush1.msra.mxu0 0.0
        %785 = vmatprep.subr.mxu0 0.0
        %786 = vmatpush1.msra.mxu0 0.0
        %787 = vmatprep.subr.mxu0 0.0
        %788 = vmatpush1.msra.mxu0 0.0
        %789 = vmatprep.subr.mxu0 0.0
        %790 = vmatpush1.msra.mxu0 0.0
        %791 = vmatprep.subr.mxu0 0.0
        %792 = vmatpush1.msra.mxu0 0.0
        %793 = vmatprep.subr.mxu0 0.0
        %794 = vmatpush1.msra.mxu0 0.0
        %795 = vmatprep.subr.mxu0 0.0
        %796 = vmatpush1.msra.mxu0 0.0
        %797 = vmatprep.subr.mxu0 0.0
        %798 = vmatpush1.msra.mxu0 0.0
        %799 = vmatprep.subr.mxu0 0.0
        %800 = vmatpush1.msra.mxu0 0.0
        %801 = vmatprep.subr.mxu0 0.0
        %802 = vmatpush1.msra.mxu0 0.0
        %803 = vmatprep.subr.mxu0 0.0
        %804 = vmatpush1.msra.mxu0 0.0
        %805 = vmatprep.subr.mxu0 0.0
        %806 = vmatpush1.msra.mxu0 0.0
        %807 = vmatprep.subr.mxu0 0.0
        %808 = vmatpush1.msra.mxu0 0.0
        %809 = vmatprep.subr.mxu0 0.0
        %810 = vmatpush1.msra.mxu0 0.0
        %811 = vmatprep.mubr.f32.mxu0 0.0
        %812 = vmatmul.mubr.f32.gmra.mrb[0].mxu0 %v255
        %v813 = vpop.f32.mrb[0].mxu0
        %v814 = vadd.f32 0.0, %v813
        %v815 = vpop.f32.mrb[0].mxu0
        %816 = vdwg.mxu0
        %v817 = vld [vmem:[%s2] sm:$0xff]
        %819 = vrot.lane.b32.xlu0 %v324, 124
        %v820 = vpop.permute.xlu0 %819
        %vm821 = vcmask 31744
        %v822 = vsel %vm821, %v324, 0
        %v824 = vsel %vm821, %v820, 0
        %826 = vmatprep.subr.mxu0 0.0
        %827 = vmatpush1.xpose.msra.mxu0 %v824
        %828 = vmatprep.subr.mxu0 0.0
        %829 = vmatpush1.xpose.msra.mxu0 0.0
        %830 = vmatprep.subr.mxu0 0.0
        %831 = vmatpush1.xpose.msra.mxu0 0.0
        %832 = vmatprep.subr.mxu0 0.0
        %833 = vmatpush1.xpose.msra.mxu0 0.0
        %834 = vmatprep.subr.mxu0 0.0
        %835 = vmatpush1.xpose.msra.mxu0 0.0
        %836 = vmatprep.subr.mxu0 0.0
        %837 = vmatpush1.xpose.msra.mxu0 0.0
        %838 = vmatprep.subr.mxu0 0.0
        %839 = vmatpush1.xpose.msra.mxu0 0.0
        %840 = vmatprep.subr.mxu0 0.0
        %841 = vmatpush1.xpose.msra.mxu0 0.0
        %842 = vmatprep.subr.mxu0 0.0
        %843 = vmatpush1.xpose.msra.mxu0 0.0
        %844 = vmatprep.subr.mxu0 0.0
        %845 = vmatpush1.xpose.msra.mxu0 0.0
        %846 = vmatprep.subr.mxu0 0.0
        %847 = vmatpush1.xpose.msra.mxu0 0.0
        %848 = vmatprep.subr.mxu0 0.0
        %849 = vmatpush1.xpose.msra.mxu0 0.0
        %850 = vmatprep.subr.mxu0 0.0
        %851 = vmatpush1.xpose.msra.mxu0 0.0
        %852 = vmatprep.subr.mxu0 0.0
        %853 = vmatpush1.xpose.msra.mxu0 0.0
        %854 = vmatprep.subr.mxu0 0.0
        %855 = vmatpush1.xpose.msra.mxu0 0.0
        %856 = vmatprep.subr.mxu0 0.0
        %857 = vmatpush1.xpose.msra.mxu0 0.0
        %858 = vmatprep.subr.mxu0 0.0
        %859 = vmatpush1.xpose.msra.mxu0 0.0
        %860 = vmatprep.subr.mxu0 0.0
        %861 = vmatpush1.xpose.msra.mxu0 0.0
        %862 = vmatprep.subr.mxu0 0.0
        %863 = vmatpush1.xpose.msra.mxu0 0.0
        %864 = vmatprep.subr.mxu0 0.0
        %865 = vmatpush1.xpose.msra.mxu0 0.0
        %866 = vmatprep.subr.mxu0 0.0
        %867 = vmatpush1.xpose.msra.mxu0 0.0
        %868 = vmatprep.subr.mxu0 0.0
        %869 = vmatpush1.xpose.msra.mxu0 0.0
        %870 = vmatprep.subr.mxu0 0.0
        %871 = vmatpush1.xpose.msra.mxu0 0.0
        %872 = vmatprep.subr.mxu0 0.0
        %873 = vmatpush1.xpose.msra.mxu0 0.0
        %874 = vmatprep.subr.mxu0 0.0
        %875 = vmatpush1.xpose.msra.mxu0 0.0
        %876 = vmatprep.subr.mxu0 0.0
        %877 = vmatpush1.xpose.msra.mxu0 0.0
        %878 = vmatprep.subr.mxu0 0.0
        %879 = vmatpush1.xpose.msra.mxu0 0.0
        %880 = vmatprep.subr.mxu0 0.0
        %881 = vmatpush1.xpose.msra.mxu0 0.0
        %882 = vmatprep.subr.mxu0 0.0
        %883 = vmatpush1.xpose.msra.mxu0 0.0
        %884 = vmatprep.subr.mxu0 0.0
        %885 = vmatpush1.xpose.msra.mxu0 0.0
        %886 = vmatprep.subr.mxu0 0.0
        %887 = vmatpush1.xpose.msra.mxu0 0.0
        %888 = vmatprep.subr.mxu0 0.0
        %889 = vmatpush1.xpose.msra.mxu0 0.0
        %890 = vmatprep.mubr.f32.mxu0 0.0
        %891 = vmatmul.mubr.f32.gmra.mrb[0].mxu0 %v822
        %v892 = vpop.f32.mrb[0].mxu0
        %v893 = vadd.f32 %v817, %v892
        %v894 = vpop.f32.mrb[0].mxu0
        %895 = vdwg.mxu0
        %897 = vrot.lane.b32.xlu0 %v394, 124
        %v898 = vpop.permute.xlu0 %897
        %v899 = vsel %vm821, %v394, 0
        %v901 = vsel %vm821, %v898, 0
        %903 = vmatprep.subr.mxu0 0.0
        %904 = vmatpush1.xpose.msra.mxu0 %v901
        %905 = vmatprep.subr.mxu0 0.0
        %906 = vmatpush1.xpose.msra.mxu0 0.0
        %907 = vmatprep.subr.mxu0 0.0
        %908 = vmatpush1.xpose.msra.mxu0 0.0
        %909 = vmatprep.subr.mxu0 0.0
        %910 = vmatpush1.xpose.msra.mxu0 0.0
        %911 = vmatprep.subr.mxu0 0.0
        %912 = vmatpush1.xpose.msra.mxu0 0.0
        %913 = vmatprep.subr.mxu0 0.0
        %914 = vmatpush1.xpose.msra.mxu0 0.0
        %915 = vmatprep.subr.mxu0 0.0
        %916 = vmatpush1.xpose.msra.mxu0 0.0
        %917 = vmatprep.subr.mxu0 0.0
        %918 = vmatpush1.xpose.msra.mxu0 0.0
        %919 = vmatprep.subr.mxu0 0.0
        %920 = vmatpush1.xpose.msra.mxu0 0.0
        %921 = vmatprep.subr.mxu0 0.0
        %922 = vmatpush1.xpose.msra.mxu0 0.0
        %923 = vmatprep.subr.mxu0 0.0
        %924 = vmatpush1.xpose.msra.mxu0 0.0
        %925 = vmatprep.subr.mxu0 0.0
        %926 = vmatpush1.xpose.msra.mxu0 0.0
        %927 = vmatprep.subr.mxu0 0.0
        %928 = vmatpush1.xpose.msra.mxu0 0.0
        %929 = vmatprep.subr.mxu0 0.0
        %930 = vmatpush1.xpose.msra.mxu0 0.0
        %931 = vmatprep.subr.mxu0 0.0
        %932 = vmatpush1.xpose.msra.mxu0 0.0
        %933 = vmatprep.subr.mxu0 0.0
        %934 = vmatpush1.xpose.msra.mxu0 0.0
        %935 = vmatprep.subr.mxu0 0.0
        %936 = vmatpush1.xpose.msra.mxu0 0.0
        %937 = vmatprep.subr.mxu0 0.0
        %938 = vmatpush1.xpose.msra.mxu0 0.0
        %939 = vmatprep.subr.mxu0 0.0
        %940 = vmatpush1.xpose.msra.mxu0 0.0
        %941 = vmatprep.subr.mxu0 0.0
        %942 = vmatpush1.xpose.msra.mxu0 0.0
        %943 = vmatprep.subr.mxu0 0.0
        %944 = vmatpush1.xpose.msra.mxu0 0.0
        %945 = vmatprep.subr.mxu0 0.0
        %946 = vmatpush1.xpose.msra.mxu0 0.0
        %947 = vmatprep.subr.mxu0 0.0
        %948 = vmatpush1.xpose.msra.mxu0 0.0
        %949 = vmatprep.subr.mxu0 0.0
        %950 = vmatpush1.xpose.msra.mxu0 0.0
        %951 = vmatprep.subr.mxu0 0.0
        %952 = vmatpush1.xpose.msra.mxu0 0.0
        %953 = vmatprep.subr.mxu0 0.0
        %954 = vmatpush1.xpose.msra.mxu0 0.0
        %955 = vmatprep.subr.mxu0 0.0
        %956 = vmatpush1.xpose.msra.mxu0 0.0
        %957 = vmatprep.subr.mxu0 0.0
        %958 = vmatpush1.xpose.msra.mxu0 0.0
        %959 = vmatprep.subr.mxu0 0.0
        %960 = vmatpush1.xpose.msra.mxu0 0.0
        %961 = vmatprep.subr.mxu0 0.0
        %962 = vmatpush1.xpose.msra.mxu0 0.0
        %963 = vmatprep.subr.mxu0 0.0
        %964 = vmatpush1.xpose.msra.mxu0 0.0
        %965 = vmatprep.subr.mxu0 0.0
        %966 = vmatpush1.xpose.msra.mxu0 0.0
        %967 = vmatprep.mubr.f32.mxu0 0.0
        %968 = vmatmul.mubr.f32.gmra.mrb[0].mxu0 %v899
        %v969 = vpop.f32.mrb[0].mxu0
        %v970 = vadd.f32 %v817, %v969
        %v971 = vpop.f32.mrb[0].mxu0
        %972 = vdwg.mxu0
        %974 = vrot.lane.b32.xlu0 %v464, 124
        %v975 = vpop.permute.xlu0 %974
        %v976 = vsel %vm821, %v464, 0
        %v978 = vsel %vm821, %v975, 0
        %980 = vmatprep.subr.mxu0 0.0
        %981 = vmatpush1.xpose.msra.mxu0 %v978
        %982 = vmatprep.subr.mxu0 0.0
        %983 = vmatpush1.xpose.msra.mxu0 0.0
        %984 = vmatprep.subr.mxu0 0.0
        %985 = vmatpush1.xpose.msra.mxu0 0.0
        %986 = vmatprep.subr.mxu0 0.0
        %987 = vmatpush1.xpose.msra.mxu0 0.0
        %988 = vmatprep.subr.mxu0 0.0
        %989 = vmatpush1.xpose.msra.mxu0 0.0
        %990 = vmatprep.subr.mxu0 0.0
        %991 = vmatpush1.xpose.msra.mxu0 0.0
        %992 = vmatprep.subr.mxu0 0.0
        %993 = vmatpush1.xpose.msra.mxu0 0.0
        %994 = vmatprep.subr.mxu0 0.0
        %995 = vmatpush1.xpose.msra.mxu0 0.0
        %996 = vmatprep.subr.mxu0 0.0
        %997 = vmatpush1.xpose.msra.mxu0 0.0
        %998 = vmatprep.subr.mxu0 0.0
        %999 = vmatpush1.xpose.msra.mxu0 0.0
        %1000 = vmatprep.subr.mxu0 0.0
        %1001 = vmatpush1.xpose.msra.mxu0 0.0
        %1002 = vmatprep.subr.mxu0 0.0
        %1003 = vmatpush1.xpose.msra.mxu0 0.0
        %1004 = vmatprep.subr.mxu0 0.0
        %1005 = vmatpush1.xpose.msra.mxu0 0.0
        %1006 = vmatprep.subr.mxu0 0.0
        %1007 = vmatpush1.xpose.msra.mxu0 0.0
        %1008 = vmatprep.subr.mxu0 0.0
        %1009 = vmatpush1.xpose.msra.mxu0 0.0
        %1010 = vmatprep.subr.mxu0 0.0
        %1011 = vmatpush1.xpose.msra.mxu0 0.0
        %1012 = vmatprep.subr.mxu0 0.0
        %1013 = vmatpush1.xpose.msra.mxu0 0.0
        %1014 = vmatprep.subr.mxu0 0.0
        %1015 = vmatpush1.xpose.msra.mxu0 0.0
        %1016 = vmatprep.subr.mxu0 0.0
        %1017 = vmatpush1.xpose.msra.mxu0 0.0
        %1018 = vmatprep.subr.mxu0 0.0
        %1019 = vmatpush1.xpose.msra.mxu0 0.0
        %1020 = vmatprep.subr.mxu0 0.0
        %1021 = vmatpush1.xpose.msra.mxu0 0.0
        %1022 = vmatprep.subr.mxu0 0.0
        %1023 = vmatpush1.xpose.msra.mxu0 0.0
        %1024 = vmatprep.subr.mxu0 0.0
        %1025 = vmatpush1.xpose.msra.mxu0 0.0
        %1026 = vmatprep.subr.mxu0 0.0
        %1027 = vmatpush1.xpose.msra.mxu0 0.0
        %1028 = vmatprep.subr.mxu0 0.0
        %1029 = vmatpush1.xpose.msra.mxu0 0.0
        %1030 = vmatprep.subr.mxu0 0.0
        %1031 = vmatpush1.xpose.msra.mxu0 0.0
        %1032 = vmatprep.subr.mxu0 0.0
        %1033 = vmatpush1.xpose.msra.mxu0 0.0
        %1034 = vmatprep.subr.mxu0 0.0
        %1035 = vmatpush1.xpose.msra.mxu0 0.0
        %1036 = vmatprep.subr.mxu0 0.0
        %1037 = vmatpush1.xpose.msra.mxu0 0.0
        %1038 = vmatprep.subr.mxu0 0.0
        %1039 = vmatpush1.xpose.msra.mxu0 0.0
        %1040 = vmatprep.subr.mxu0 0.0
        %1041 = vmatpush1.xpose.msra.mxu0 0.0
        %1042 = vmatprep.subr.mxu0 0.0
        %1043 = vmatpush1.xpose.msra.mxu0 0.0
        %1044 = vmatprep.mubr.f32.mxu0 0.0
        %1045 = vmatmul.mubr.f32.gmra.mrb[0].mxu0 %v976
        %v1046 = vpop.f32.mrb[0].mxu0
        %v1047 = vadd.f32 %v817, %v1046
        %v1048 = vpop.f32.mrb[0].mxu0
        %1049 = vdwg.mxu0
        %1051 = vrot.lane.b32.xlu0 %v534, 124
        %v1052 = vpop.permute.xlu0 %1051
        %v1053 = vsel %vm821, %v534, 0
        %v1055 = vsel %vm821, %v1052, 0
        %1057 = vmatprep.subr.mxu0 0.0
        %1058 = vmatpush1.xpose.msra.mxu0 %v1055
        %1059 = vmatprep.subr.mxu0 0.0
        %1060 = vmatpush1.xpose.msra.mxu0 0.0
        %1061 = vmatprep.subr.mxu0 0.0
        %1062 = vmatpush1.xpose.msra.mxu0 0.0
        %1063 = vmatprep.subr.mxu0 0.0
        %1064 = vmatpush1.xpose.msra.mxu0 0.0
        %1065 = vmatprep.subr.mxu0 0.0
        %1066 = vmatpush1.xpose.msra.mxu0 0.0
        %1067 = vmatprep.subr.mxu0 0.0
        %1068 = vmatpush1.xpose.msra.mxu0 0.0
        %1069 = vmatprep.subr.mxu0 0.0
        %1070 = vmatpush1.xpose.msra.mxu0 0.0
        %1071 = vmatprep.subr.mxu0 0.0
        %1072 = vmatpush1.xpose.msra.mxu0 0.0
        %1073 = vmatprep.subr.mxu0 0.0
        %1074 = vmatpush1.xpose.msra.mxu0 0.0
        %1075 = vmatprep.subr.mxu0 0.0
        %1076 = vmatpush1.xpose.msra.mxu0 0.0
        %1077 = vmatprep.subr.mxu0 0.0
        %1078 = vmatpush1.xpose.msra.mxu0 0.0
        %1079 = vmatprep.subr.mxu0 0.0
        %1080 = vmatpush1.xpose.msra.mxu0 0.0
        %1081 = vmatprep.subr.mxu0 0.0
        %1082 = vmatpush1.xpose.msra.mxu0 0.0
        %1083 = vmatprep.subr.mxu0 0.0
        %1084 = vmatpush1.xpose.msra.mxu0 0.0
        %1085 = vmatprep.subr.mxu0 0.0
        %1086 = vmatpush1.xpose.msra.mxu0 0.0
        %1087 = vmatprep.subr.mxu0 0.0
        %1088 = vmatpush1.xpose.msra.mxu0 0.0
        %1089 = vmatprep.subr.mxu0 0.0
        %1090 = vmatpush1.xpose.msra.mxu0 0.0
        %1091 = vmatprep.subr.mxu0 0.0
        %1092 = vmatpush1.xpose.msra.mxu0 0.0
        %1093 = vmatprep.subr.mxu0 0.0
        %1094 = vmatpush1.xpose.msra.mxu0 0.0
        %1095 = vmatprep.subr.mxu0 0.0
        %1096 = vmatpush1.xpose.msra.mxu0 0.0
        %1097 = vmatprep.subr.mxu0 0.0
        %1098 = vmatpush1.xpose.msra.mxu0 0.0
        %1099 = vmatprep.subr.mxu0 0.0
        %1100 = vmatpush1.xpose.msra.mxu0 0.0
        %1101 = vmatprep.subr.mxu0 0.0
        %1102 = vmatpush1.xpose.msra.mxu0 0.0
        %1103 = vmatprep.subr.mxu0 0.0
        %1104 = vmatpush1.xpose.msra.mxu0 0.0
        %1105 = vmatprep.subr.mxu0 0.0
        %1106 = vmatpush1.xpose.msra.mxu0 0.0
        %1107 = vmatprep.subr.mxu0 0.0
        %1108 = vmatpush1.xpose.msra.mxu0 0.0
        %1109 = vmatprep.subr.mxu0 0.0
        %1110 = vmatpush1.xpose.msra.mxu0 0.0
        %1111 = vmatprep.subr.mxu0 0.0
        %1112 = vmatpush1.xpose.msra.mxu0 0.0
        %1113 = vmatprep.subr.mxu0 0.0
        %1114 = vmatpush1.xpose.msra.mxu0 0.0
        %1115 = vmatprep.subr.mxu0 0.0
        %1116 = vmatpush1.xpose.msra.mxu0 0.0
        %1117 = vmatprep.subr.mxu0 0.0
        %1118 = vmatpush1.xpose.msra.mxu0 0.0
        %1119 = vmatprep.subr.mxu0 0.0
        %1120 = vmatpush1.xpose.msra.mxu0 0.0
        %1121 = vmatprep.mubr.f32.mxu0 0.0
        %1122 = vmatmul.mubr.f32.gmra.mrb[0].mxu0 %v1053
        %v1123 = vpop.f32.mrb[0].mxu0
        %v1124 = vadd.f32 %v817, %v1123
        %v1125 = vpop.f32.mrb[0].mxu0
        %1126 = vdwg.mxu0
        %1128 = vrot.lane.b32.xlu0 %v604, 124
        %v1129 = vpop.permute.xlu0 %1128
        %v1130 = vsel %vm821, %v604, 0
        %v1132 = vsel %vm821, %v1129, 0
        %1134 = vmatprep.subr.mxu0 0.0
        %1135 = vmatpush1.xpose.msra.mxu0 %v1132
        %1136 = vmatprep.subr.mxu0 0.0
        %1137 = vmatpush1.xpose.msra.mxu0 0.0
        %1138 = vmatprep.subr.mxu0 0.0
        %1139 = vmatpush1.xpose.msra.mxu0 0.0
        %1140 = vmatprep.subr.mxu0 0.0
        %1141 = vmatpush1.xpose.msra.mxu0 0.0
        %1142 = vmatprep.subr.mxu0 0.0
        %1143 = vmatpush1.xpose.msra.mxu0 0.0
        %1144 = vmatprep.subr.mxu0 0.0
        %1145 = vmatpush1.xpose.msra.mxu0 0.0
        %1146 = vmatprep.subr.mxu0 0.0
        %1147 = vmatpush1.xpose.msra.mxu0 0.0
        %1148 = vmatprep.subr.mxu0 0.0
        %1149 = vmatpush1.xpose.msra.mxu0 0.0
        %1150 = vmatprep.subr.mxu0 0.0
        %1151 = vmatpush1.xpose.msra.mxu0 0.0
        %1152 = vmatprep.subr.mxu0 0.0
        %1153 = vmatpush1.xpose.msra.mxu0 0.0
        %1154 = vmatprep.subr.mxu0 0.0
        %1155 = vmatpush1.xpose.msra.mxu0 0.0
        %1156 = vmatprep.subr.mxu0 0.0
        %1157 = vmatpush1.xpose.msra.mxu0 0.0
        %1158 = vmatprep.subr.mxu0 0.0
        %1159 = vmatpush1.xpose.msra.mxu0 0.0
        %1160 = vmatprep.subr.mxu0 0.0
        %1161 = vmatpush1.xpose.msra.mxu0 0.0
        %1162 = vmatprep.subr.mxu0 0.0
        %1163 = vmatpush1.xpose.msra.mxu0 0.0
        %1164 = vmatprep.subr.mxu0 0.0
        %1165 = vmatpush1.xpose.msra.mxu0 0.0
        %1166 = vmatprep.subr.mxu0 0.0
        %1167 = vmatpush1.xpose.msra.mxu0 0.0
        %1168 = vmatprep.subr.mxu0 0.0
        %1169 = vmatpush1.xpose.msra.mxu0 0.0
        %1170 = vmatprep.subr.mxu0 0.0
        %1171 = vmatpush1.xpose.msra.mxu0 0.0
        %1172 = vmatprep.subr.mxu0 0.0
        %1173 = vmatpush1.xpose.msra.mxu0 0.0
        %1174 = vmatprep.subr.mxu0 0.0
        %1175 = vmatpush1.xpose.msra.mxu0 0.0
        %1176 = vmatprep.subr.mxu0 0.0
        %1177 = vmatpush1.xpose.msra.mxu0 0.0
        %1178 = vmatprep.subr.mxu0 0.0
        %1179 = vmatpush1.xpose.msra.mxu0 0.0
        %1180 = vmatprep.subr.mxu0 0.0
        %1181 = vmatpush1.xpose.msra.mxu0 0.0
        %1182 = vmatprep.subr.mxu0 0.0
        %1183 = vmatpush1.xpose.msra.mxu0 0.0
        %1184 = vmatprep.subr.mxu0 0.0
        %1185 = vmatpush1.xpose.msra.mxu0 0.0
        %1186 = vmatprep.subr.mxu0 0.0
        %1187 = vmatpush1.xpose.msra.mxu0 0.0
        %1188 = vmatprep.subr.mxu0 0.0
        %1189 = vmatpush1.xpose.msra.mxu0 0.0
        %1190 = vmatprep.subr.mxu0 0.0
        %1191 = vmatpush1.xpose.msra.mxu0 0.0
        %1192 = vmatprep.subr.mxu0 0.0
        %1193 = vmatpush1.xpose.msra.mxu0 0.0
        %1194 = vmatprep.subr.mxu0 0.0
        %1195 = vmatpush1.xpose.msra.mxu0 0.0
        %1196 = vmatprep.subr.mxu0 0.0
        %1197 = vmatpush1.xpose.msra.mxu0 0.0
        %1198 = vmatprep.mubr.f32.mxu0 0.0
        %1199 = vmatmul.mubr.f32.gmra.mrb[0].mxu0 %v1130
        %v1200 = vpop.f32.mrb[0].mxu0
        %v1201 = vadd.f32 %v817, %v1200
        %v1202 = vpop.f32.mrb[0].mxu0
        %1203 = vdwg.mxu0
        %1205 = vrot.lane.b32.xlu0 %v674, 124
        %v1206 = vpop.permute.xlu0 %1205
        %v1207 = vsel %vm821, %v674, 0
        %v1209 = vsel %vm821, %v1206, 0
        %1211 = vmatprep.subr.mxu0 0.0
        %1212 = vmatpush1.xpose.msra.mxu0 %v1209
        %1213 = vmatprep.subr.mxu0 0.0
        %1214 = vmatpush1.xpose.msra.mxu0 0.0
        %1215 = vmatprep.subr.mxu0 0.0
        %1216 = vmatpush1.xpose.msra.mxu0 0.0
        %1217 = vmatprep.subr.mxu0 0.0
        %1218 = vmatpush1.xpose.msra.mxu0 0.0
        %1219 = vmatprep.subr.mxu0 0.0
        %1220 = vmatpush1.xpose.msra.mxu0 0.0
        %1221 = vmatprep.subr.mxu0 0.0
        %1222 = vmatpush1.xpose.msra.mxu0 0.0
        %1223 = vmatprep.subr.mxu0 0.0
        %1224 = vmatpush1.xpose.msra.mxu0 0.0
        %1225 = vmatprep.subr.mxu0 0.0
        %1226 = vmatpush1.xpose.msra.mxu0 0.0
        %1227 = vmatprep.subr.mxu0 0.0
        %1228 = vmatpush1.xpose.msra.mxu0 0.0
        %1229 = vmatprep.subr.mxu0 0.0
        %1230 = vmatpush1.xpose.msra.mxu0 0.0
        %1231 = vmatprep.subr.mxu0 0.0
        %1232 = vmatpush1.xpose.msra.mxu0 0.0
        %1233 = vmatprep.subr.mxu0 0.0
        %1234 = vmatpush1.xpose.msra.mxu0 0.0
        %1235 = vmatprep.subr.mxu0 0.0
        %1236 = vmatpush1.xpose.msra.mxu0 0.0
        %1237 = vmatprep.subr.mxu0 0.0
        %1238 = vmatpush1.xpose.msra.mxu0 0.0
        %1239 = vmatprep.subr.mxu0 0.0
        %1240 = vmatpush1.xpose.msra.mxu0 0.0
        %1241 = vmatprep.subr.mxu0 0.0
        %1242 = vmatpush1.xpose.msra.mxu0 0.0
        %1243 = vmatprep.subr.mxu0 0.0
        %1244 = vmatpush1.xpose.msra.mxu0 0.0
        %1245 = vmatprep.subr.mxu0 0.0
        %1246 = vmatpush1.xpose.msra.mxu0 0.0
        %1247 = vmatprep.subr.mxu0 0.0
        %1248 = vmatpush1.xpose.msra.mxu0 0.0
        %1249 = vmatprep.subr.mxu0 0.0
        %1250 = vmatpush1.xpose.msra.mxu0 0.0
        %1251 = vmatprep.subr.mxu0 0.0
        %1252 = vmatpush1.xpose.msra.mxu0 0.0
        %1253 = vmatprep.subr.mxu0 0.0
        %1254 = vmatpush1.xpose.msra.mxu0 0.0
        %1255 = vmatprep.subr.mxu0 0.0
        %1256 = vmatpush1.xpose.msra.mxu0 0.0
        %1257 = vmatprep.subr.mxu0 0.0
        %1258 = vmatpush1.xpose.msra.mxu0 0.0
        %1259 = vmatprep.subr.mxu0 0.0
        %1260 = vmatpush1.xpose.msra.mxu0 0.0
        %1261 = vmatprep.subr.mxu0 0.0
        %1262 = vmatpush1.xpose.msra.mxu0 0.0
        %1263 = vmatprep.subr.mxu0 0.0
        %1264 = vmatpush1.xpose.msra.mxu0 0.0
        %1265 = vmatprep.subr.mxu0 0.0
        %1266 = vmatpush1.xpose.msra.mxu0 0.0
        %1267 = vmatprep.subr.mxu0 0.0
        %1268 = vmatpush1.xpose.msra.mxu0 0.0
        %1269 = vmatprep.subr.mxu0 0.0
        %1270 = vmatpush1.xpose.msra.mxu0 0.0
        %1271 = vmatprep.subr.mxu0 0.0
        %1272 = vmatpush1.xpose.msra.mxu0 0.0
        %1273 = vmatprep.subr.mxu0 0.0
        %1274 = vmatpush1.xpose.msra.mxu0 0.0
        %1275 = vmatprep.mubr.f32.mxu0 0.0
        %1276 = vmatmul.mubr.f32.gmra.mrb[0].mxu0 %v1207
        %v1277 = vpop.f32.mrb[0].mxu0
        %v1278 = vadd.f32 %v817, %v1277
        %v1279 = vpop.f32.mrb[0].mxu0
        %1280 = vdwg.mxu0
        %1282 = vrot.lane.b32.xlu0 %v744, 124
        %v1283 = vpop.permute.xlu0 %1282
        %v1284 = vsel %vm821, %v744, 0
        %v1286 = vsel %vm821, %v1283, 0
        %1288 = vmatprep.subr.mxu0 0.0
        %1289 = vmatpush1.xpose.msra.mxu0 %v1286
        %1290 = vmatprep.subr.mxu0 0.0
        %1291 = vmatpush1.xpose.msra.mxu0 0.0
        %1292 = vmatprep.subr.mxu0 0.0
        %1293 = vmatpush1.xpose.msra.mxu0 0.0
        %1294 = vmatprep.subr.mxu0 0.0
        %1295 = vmatpush1.xpose.msra.mxu0 0.0
        %1296 = vmatprep.subr.mxu0 0.0
        %1297 = vmatpush1.xpose.msra.mxu0 0.0
        %1298 = vmatprep.subr.mxu0 0.0
        %1299 = vmatpush1.xpose.msra.mxu0 0.0
        %1300 = vmatprep.subr.mxu0 0.0
        %1301 = vmatpush1.xpose.msra.mxu0 0.0
        %1302 = vmatprep.subr.mxu0 0.0
        %1303 = vmatpush1.xpose.msra.mxu0 0.0
        %1304 = vmatprep.subr.mxu0 0.0
        %1305 = vmatpush1.xpose.msra.mxu0 0.0
        %1306 = vmatprep.subr.mxu0 0.0
        %1307 = vmatpush1.xpose.msra.mxu0 0.0
        %1308 = vmatprep.subr.mxu0 0.0
        %1309 = vmatpush1.xpose.msra.mxu0 0.0
        %1310 = vmatprep.subr.mxu0 0.0
        %1311 = vmatpush1.xpose.msra.mxu0 0.0
        %1312 = vmatprep.subr.mxu0 0.0
        %1313 = vmatpush1.xpose.msra.mxu0 0.0
        %1314 = vmatprep.subr.mxu0 0.0
        %1315 = vmatpush1.xpose.msra.mxu0 0.0
        %1316 = vmatprep.subr.mxu0 0.0
        %1317 = vmatpush1.xpose.msra.mxu0 0.0
        %1318 = vmatprep.subr.mxu0 0.0
        %1319 = vmatpush1.xpose.msra.mxu0 0.0
        %1320 = vmatprep.subr.mxu0 0.0
        %1321 = vmatpush1.xpose.msra.mxu0 0.0
        %1322 = vmatprep.subr.mxu0 0.0
        %1323 = vmatpush1.xpose.msra.mxu0 0.0
        %1324 = vmatprep.subr.mxu0 0.0
        %1325 = vmatpush1.xpose.msra.mxu0 0.0
        %1326 = vmatprep.subr.mxu0 0.0
        %1327 = vmatpush1.xpose.msra.mxu0 0.0
        %1328 = vmatprep.subr.mxu0 0.0
        %1329 = vmatpush1.xpose.msra.mxu0 0.0
        %1330 = vmatprep.subr.mxu0 0.0
        %1331 = vmatpush1.xpose.msra.mxu0 0.0
        %1332 = vmatprep.subr.mxu0 0.0
        %1333 = vmatpush1.xpose.msra.mxu0 0.0
        %1334 = vmatprep.subr.mxu0 0.0
        %1335 = vmatpush1.xpose.msra.mxu0 0.0
        %1336 = vmatprep.subr.mxu0 0.0
        %1337 = vmatpush1.xpose.msra.mxu0 0.0
        %1338 = vmatprep.subr.mxu0 0.0
        %1339 = vmatpush1.xpose.msra.mxu0 0.0
        %1340 = vmatprep.subr.mxu0 0.0
        %1341 = vmatpush1.xpose.msra.mxu0 0.0
        %1342 = vmatprep.subr.mxu0 0.0
        %1343 = vmatpush1.xpose.msra.mxu0 0.0
        %1344 = vmatprep.subr.mxu0 0.0
        %1345 = vmatpush1.xpose.msra.mxu0 0.0
        %1346 = vmatprep.subr.mxu0 0.0
        %1347 = vmatpush1.xpose.msra.mxu0 0.0
        %1348 = vmatprep.subr.mxu0 0.0
        %1349 = vmatpush1.xpose.msra.mxu0 0.0
        %1350 = vmatprep.subr.mxu0 0.0
        %1351 = vmatpush1.xpose.msra.mxu0 0.0
        %1352 = vmatprep.mubr.f32.mxu0 0.0
        %1353 = vmatmul.mubr.f32.gmra.mrb[0].mxu0 %v1284
        %v1354 = vpop.f32.mrb[0].mxu0
        %v1355 = vadd.f32 %v817, %v1354
        %v1356 = vpop.f32.mrb[0].mxu0
        %1357 = vdwg.mxu0
        %1359 = vrot.lane.b32.xlu0 %v814, 124
        %v1360 = vpop.permute.xlu0 %1359
        %v1361 = vsel %vm821, %v814, 0
        %v1363 = vsel %vm821, %v1360, 0
        %1365 = vmatprep.subr.mxu0 0.0
        %1366 = vmatpush1.xpose.msra.mxu0 %v1363
        %1367 = vmatprep.subr.mxu0 0.0
        %1368 = vmatpush1.xpose.msra.mxu0 0.0
        %1369 = vmatprep.subr.mxu0 0.0
        %1370 = vmatpush1.xpose.msra.mxu0 0.0
        %1371 = vmatprep.subr.mxu0 0.0
        %1372 = vmatpush1.xpose.msra.mxu0 0.0
        %1373 = vmatprep.subr.mxu0 0.0
        %1374 = vmatpush1.xpose.msra.mxu0 0.0
        %1375 = vmatprep.subr.mxu0 0.0
        %1376 = vmatpush1.xpose.msra.mxu0 0.0
        %1377 = vmatprep.subr.mxu0 0.0
        %1378 = vmatpush1.xpose.msra.mxu0 0.0
        %1379 = vmatprep.subr.mxu0 0.0
        %1380 = vmatpush1.xpose.msra.mxu0 0.0
        %1381 = vmatprep.subr.mxu0 0.0
        %1382 = vmatpush1.xpose.msra.mxu0 0.0
        %1383 = vmatprep.subr.mxu0 0.0
        %1384 = vmatpush1.xpose.msra.mxu0 0.0
        %1385 = vmatprep.subr.mxu0 0.0
        %1386 = vmatpush1.xpose.msra.mxu0 0.0
        %1387 = vmatprep.subr.mxu0 0.0
        %1388 = vmatpush1.xpose.msra.mxu0 0.0
        %1389 = vmatprep.subr.mxu0 0.0
        %1390 = vmatpush1.xpose.msra.mxu0 0.0
        %1391 = vmatprep.subr.mxu0 0.0
        %1392 = vmatpush1.xpose.msra.mxu0 0.0
        %1393 = vmatprep.subr.mxu0 0.0
        %1394 = vmatpush1.xpose.msra.mxu0 0.0
        %1395 = vmatprep.subr.mxu0 0.0
        %1396 = vmatpush1.xpose.msra.mxu0 0.0
        %1397 = vmatprep.subr.mxu0 0.0
        %1398 = vmatpush1.xpose.msra.mxu0 0.0
        %1399 = vmatprep.subr.mxu0 0.0
        %1400 = vmatpush1.xpose.msra.mxu0 0.0
        %1401 = vmatprep.subr.mxu0 0.0
        %1402 = vmatpush1.xpose.msra.mxu0 0.0
        %1403 = vmatprep.subr.mxu0 0.0
        %1404 = vmatpush1.xpose.msra.mxu0 0.0
        %1405 = vmatprep.subr.mxu0 0.0
        %1406 = vmatpush1.xpose.msra.mxu0 0.0
        %1407 = vmatprep.subr.mxu0 0.0
        %1408 = vmatpush1.xpose.msra.mxu0 0.0
        %1409 = vmatprep.subr.mxu0 0.0
        %1410 = vmatpush1.xpose.msra.mxu0 0.0
        %1411 = vmatprep.subr.mxu0 0.0
        %1412 = vmatpush1.xpose.msra.mxu0 0.0
        %1413 = vmatprep.subr.mxu0 0.0
        %1414 = vmatpush1.xpose.msra.mxu0 0.0
        %1415 = vmatprep.subr.mxu0 0.0
        %1416 = vmatpush1.xpose.msra.mxu0 0.0
        %1417 = vmatprep.subr.mxu0 0.0
        %1418 = vmatpush1.xpose.msra.mxu0 0.0
        %1419 = vmatprep.subr.mxu0 0.0
        %1420 = vmatpush1.xpose.msra.mxu0 0.0
        %1421 = vmatprep.subr.mxu0 0.0
        %1422 = vmatpush1.xpose.msra.mxu0 0.0
        %1423 = vmatprep.subr.mxu0 0.0
        %1424 = vmatpush1.xpose.msra.mxu0 0.0
        %1425 = vmatprep.subr.mxu0 0.0
        %1426 = vmatpush1.xpose.msra.mxu0 0.0
        %1427 = vmatprep.subr.mxu0 0.0
        %1428 = vmatpush1.xpose.msra.mxu0 0.0
        %1429 = vmatprep.mubr.f32.mxu0 0.0
        %1430 = vmatmul.mubr.f32.gmra.mrb[0].mxu0 %v1361
        %v1431 = vpop.f32.mrb[0].mxu0
        %v1432 = vadd.f32 %v817, %v1431
        %v1433 = vpop.f32.mrb[0].mxu0
        %1434 = vdwg.mxu0
        %vm1435 = vcmask 64512
        %v1436 = vsel %vm1435, %v893, -inf
        %1437 = vmax.xlane.f32.xlu0 %v1436
        %v1438 = vpop.xlane.xlu0 %1437
        %v1439 = vsel %vm1435, %v970, -inf
        %1440 = vmax.xlane.f32.xlu0 %v1439
        %v1441 = vpop.xlane.xlu0 %1440
        %v1442 = vsel %vm1435, %v1047, -inf
        %1443 = vmax.xlane.f32.xlu0 %v1442
        %v1444 = vpop.xlane.xlu0 %1443
        %v1445 = vsel %vm1435, %v1124, -inf
        %1446 = vmax.xlane.f32.xlu0 %v1445
        %v1447 = vpop.xlane.xlu0 %1446
        %v1448 = vsel %vm1435, %v1201, -inf
        %1449 = vmax.xlane.f32.xlu0 %v1448
        %v1450 = vpop.xlane.xlu0 %1449
        %v1451 = vsel %vm1435, %v1278, -inf
        %1452 = vmax.xlane.f32.xlu0 %v1451
        %v1453 = vpop.xlane.xlu0 %1452
        %v1454 = vsel %vm1435, %v1355, -inf
        %1455 = vmax.xlane.f32.xlu0 %v1454
        %v1456 = vpop.xlane.xlu0 %1455
        %v1457 = vsel %vm1435, %v1432, -inf
        %1458 = vmax.xlane.f32.xlu0 %v1457
        %v1459 = vpop.xlane.xlu0 %1458
        %v1460 = vsub.f32 %v893, %v1438
        %v1461 = vsub.f32 %v970, %v1441
        %v1462 = vsub.f32 %v1047, %v1444
        %v1463 = vsub.f32 %v1124, %v1447
        %v1464 = vsub.f32 %v1201, %v1450
        %v1465 = vsub.f32 %v1278, %v1453
        %v1466 = vsub.f32 %v1355, %v1456
        %v1467 = vsub.f32 %v1432, %v1459
        %v1468 = vmul.f32 %v1460, 1.442695
        %v1469 = vpow.pop %v1468
        %v1470 = vmul.f32 %v1461, 1.442695
        %v1471 = vpow.pop %v1470
        %v1472 = vmul.f32 %v1462, 1.442695
        %v1473 = vpow.pop %v1472
        %v1474 = vmul.f32 %v1463, 1.442695
        %v1475 = vpow.pop %v1474
        %v1476 = vmul.f32 %v1464, 1.442695
        %v1477 = vpow.pop %v1476
        %v1478 = vmul.f32 %v1465, 1.442695
        %v1479 = vpow.pop %v1478
        %v1480 = vmul.f32 %v1466, 1.442695
        %v1481 = vpow.pop %v1480
        %v1482 = vmul.f32 %v1467, 1.442695
        %v1483 = vpow.pop %v1482
        %v1484 = vsel %vm1435, %v1469, 0.0
        %1485 = vadd.xlane.f32.xlu0 %v1484
        %v1486 = vpop.xlane.xlu0 %1485
        %v1487 = vsel %vm1435, %v1471, 0.0
        %1488 = vadd.xlane.f32.xlu0 %v1487
        %v1489 = vpop.xlane.xlu0 %1488
        %v1490 = vsel %vm1435, %v1473, 0.0
        %1491 = vadd.xlane.f32.xlu0 %v1490
        %v1492 = vpop.xlane.xlu0 %1491
        %v1493 = vsel %vm1435, %v1475, 0.0
        %1494 = vadd.xlane.f32.xlu0 %v1493
        %v1495 = vpop.xlane.xlu0 %1494
        %v1496 = vsel %vm1435, %v1477, 0.0
        %1497 = vadd.xlane.f32.xlu0 %v1496
        %v1498 = vpop.xlane.xlu0 %1497
        %v1499 = vsel %vm1435, %v1479, 0.0
        %1500 = vadd.xlane.f32.xlu0 %v1499
        %v1501 = vpop.xlane.xlu0 %1500
        %v1502 = vsel %vm1435, %v1481, 0.0
        %1503 = vadd.xlane.f32.xlu0 %v1502
        %v1504 = vpop.xlane.xlu0 %1503
        %v1505 = vsel %vm1435, %v1483, 0.0
        %1506 = vadd.xlane.f32.xlu0 %v1505
        %v1507 = vpop.xlane.xlu0 %1506
        %v1508 = vrcp.pop %v1486
        %v1509 = vrcp.pop %v1489
        %v1510 = vrcp.pop %v1492
        %v1511 = vrcp.pop %v1495
        %v1512 = vrcp.pop %v1498
        %v1513 = vrcp.pop %v1501
        %v1514 = vrcp.pop %v1504
        %v1515 = vrcp.pop %v1507
        %v1516 = vmul.f32 %v1469, %v1508
        %v1517 = vmul.f32 %v1471, %v1509
        %v1518 = vmul.f32 %v1473, %v1510
        %v1519 = vmul.f32 %v1475, %v1511
        %v1520 = vmul.f32 %v1477, %v1512
        %v1521 = vmul.f32 %v1479, %v1513
        %v1522 = vmul.f32 %v1481, %v1514
        %v1523 = vmul.f32 %v1483, %v1515
        %1524 = vrot.lane.b32.xlu0 %v324, 120
        %v1525 = vpop.permute.xlu0 %1524
        %v1528 = vsel %vm1435, %v1516, 0
        %1530 = vmatprep.subr.mxu0 0.0
        %1531 = vmatpush1.msra.mxu0 %v1525
        %1532 = vmatprep.subr.mxu0 0.0
        %1533 = vmatpush1.msra.mxu0 0.0
        %1534 = vmatprep.subr.mxu0 0.0
        %1535 = vmatpush1.msra.mxu0 0.0
        %1536 = vmatprep.subr.mxu0 0.0
        %1537 = vmatpush1.msra.mxu0 0.0
        %1538 = vmatprep.subr.mxu0 0.0
        %1539 = vmatpush1.msra.mxu0 0.0
        %1540 = vmatprep.subr.mxu0 0.0
        %1541 = vmatpush1.msra.mxu0 0.0
        %1542 = vmatprep.subr.mxu0 0.0
        %1543 = vmatpush1.msra.mxu0 0.0
        %1544 = vmatprep.subr.mxu0 0.0
        %1545 = vmatpush1.msra.mxu0 0.0
        %1546 = vmatprep.subr.mxu0 0.0
        %1547 = vmatpush1.msra.mxu0 0.0
        %1548 = vmatprep.subr.mxu0 0.0
        %1549 = vmatpush1.msra.mxu0 0.0
        %1550 = vmatprep.subr.mxu0 0.0
        %1551 = vmatpush1.msra.mxu0 0.0
        %1552 = vmatprep.subr.mxu0 0.0
        %1553 = vmatpush1.msra.mxu0 0.0
        %1554 = vmatprep.subr.mxu0 0.0
        %1555 = vmatpush1.msra.mxu0 0.0
        %1556 = vmatprep.subr.mxu0 0.0
        %1557 = vmatpush1.msra.mxu0 0.0
        %1558 = vmatprep.subr.mxu0 0.0
        %1559 = vmatpush1.msra.mxu0 0.0
        %1560 = vmatprep.subr.mxu0 0.0
        %1561 = vmatpush1.msra.mxu0 0.0
        %1562 = vmatprep.subr.mxu0 0.0
        %1563 = vmatpush1.msra.mxu0 0.0
        %1564 = vmatprep.subr.mxu0 0.0
        %1565 = vmatpush1.msra.mxu0 0.0
        %1566 = vmatprep.subr.mxu0 0.0
        %1567 = vmatpush1.msra.mxu0 0.0
        %1568 = vmatprep.subr.mxu0 0.0
        %1569 = vmatpush1.msra.mxu0 0.0
        %1570 = vmatprep.subr.mxu0 0.0
        %1571 = vmatpush1.msra.mxu0 0.0
        %1572 = vmatprep.subr.mxu0 0.0
        %1573 = vmatpush1.msra.mxu0 0.0
        %1574 = vmatprep.subr.mxu0 0.0
        %1575 = vmatpush1.msra.mxu0 0.0
        %1576 = vmatprep.subr.mxu0 0.0
        %1577 = vmatpush1.msra.mxu0 0.0
        %1578 = vmatprep.subr.mxu0 0.0
        %1579 = vmatpush1.msra.mxu0 0.0
        %1580 = vmatprep.subr.mxu0 0.0
        %1581 = vmatpush1.msra.mxu0 0.0
        %1582 = vmatprep.subr.mxu0 0.0
        %1583 = vmatpush1.msra.mxu0 0.0
        %1584 = vmatprep.subr.mxu0 0.0
        %1585 = vmatpush1.msra.mxu0 0.0
        %1586 = vmatprep.subr.mxu0 0.0
        %1587 = vmatpush1.msra.mxu0 0.0
        %1588 = vmatprep.subr.mxu0 0.0
        %1589 = vmatpush1.msra.mxu0 0.0
        %1590 = vmatprep.subr.mxu0 0.0
        %1591 = vmatpush1.msra.mxu0 0.0
        %1592 = vmatprep.subr.mxu0 0.0
        %1593 = vmatpush1.msra.mxu0 0.0
        %1594 = vmatprep.mubr.f32.mxu0 0.0
        %1595 = vmatmul.mubr.f32.gmra.mrb[0].mxu0 %v1528
        %v1596 = vpop.f32.mrb[0].mxu0
        %v1597 = vadd.f32 0.0, %v1596
        %v1598 = vpop.f32.mrb[0].mxu0
        %1599 = vdwg.mxu0
        %1600 = vrot.lane.b32.xlu0 %v394, 120
        %v1601 = vpop.permute.xlu0 %1600
        %v1604 = vsel %vm1435, %v1517, 0
        %1606 = vmatprep.subr.mxu0 0.0
        %1607 = vmatpush1.msra.mxu0 %v1601
        %1608 = vmatprep.subr.mxu0 0.0
        %1609 = vmatpush1.msra.mxu0 0.0
        %1610 = vmatprep.subr.mxu0 0.0
        %1611 = vmatpush1.msra.mxu0 0.0
        %1612 = vmatprep.subr.mxu0 0.0
        %1613 = vmatpush1.msra.mxu0 0.0
        %1614 = vmatprep.subr.mxu0 0.0
        %1615 = vmatpush1.msra.mxu0 0.0
        %1616 = vmatprep.subr.mxu0 0.0
        %1617 = vmatpush1.msra.mxu0 0.0
        %1618 = vmatprep.subr.mxu0 0.0
        %1619 = vmatpush1.msra.mxu0 0.0
        %1620 = vmatprep.subr.mxu0 0.0
        %1621 = vmatpush1.msra.mxu0 0.0
        %1622 = vmatprep.subr.mxu0 0.0
        %1623 = vmatpush1.msra.mxu0 0.0
        %1624 = vmatprep.subr.mxu0 0.0
        %1625 = vmatpush1.msra.mxu0 0.0
        %1626 = vmatprep.subr.mxu0 0.0
        %1627 = vmatpush1.msra.mxu0 0.0
        %1628 = vmatprep.subr.mxu0 0.0
        %1629 = vmatpush1.msra.mxu0 0.0
        %1630 = vmatprep.subr.mxu0 0.0
        %1631 = vmatpush1.msra.mxu0 0.0
        %1632 = vmatprep.subr.mxu0 0.0
        %1633 = vmatpush1.msra.mxu0 0.0
        %1634 = vmatprep.subr.mxu0 0.0
        %1635 = vmatpush1.msra.mxu0 0.0
        %1636 = vmatprep.subr.mxu0 0.0
        %1637 = vmatpush1.msra.mxu0 0.0
        %1638 = vmatprep.subr.mxu0 0.0
        %1639 = vmatpush1.msra.mxu0 0.0
        %1640 = vmatprep.subr.mxu0 0.0
        %1641 = vmatpush1.msra.mxu0 0.0
        %1642 = vmatprep.subr.mxu0 0.0
        %1643 = vmatpush1.msra.mxu0 0.0
        %1644 = vmatprep.subr.mxu0 0.0
        %1645 = vmatpush1.msra.mxu0 0.0
        %1646 = vmatprep.subr.mxu0 0.0
        %1647 = vmatpush1.msra.mxu0 0.0
        %1648 = vmatprep.subr.mxu0 0.0
        %1649 = vmatpush1.msra.mxu0 0.0
        %1650 = vmatprep.subr.mxu0 0.0
        %1651 = vmatpush1.msra.mxu0 0.0
        %1652 = vmatprep.subr.mxu0 0.0
        %1653 = vmatpush1.msra.mxu0 0.0
        %1654 = vmatprep.subr.mxu0 0.0
        %1655 = vmatpush1.msra.mxu0 0.0
        %1656 = vmatprep.subr.mxu0 0.0
        %1657 = vmatpush1.msra.mxu0 0.0
        %1658 = vmatprep.subr.mxu0 0.0
        %1659 = vmatpush1.msra.mxu0 0.0
        %1660 = vmatprep.subr.mxu0 0.0
        %1661 = vmatpush1.msra.mxu0 0.0
        %1662 = vmatprep.subr.mxu0 0.0
        %1663 = vmatpush1.msra.mxu0 0.0
        %1664 = vmatprep.subr.mxu0 0.0
        %1665 = vmatpush1.msra.mxu0 0.0
        %1666 = vmatprep.subr.mxu0 0.0
        %1667 = vmatpush1.msra.mxu0 0.0
        %1668 = vmatprep.subr.mxu0 0.0
        %1669 = vmatpush1.msra.mxu0 0.0
        %1670 = vmatprep.mubr.f32.mxu0 0.0
        %1671 = vmatmul.mubr.f32.gmra.mrb[0].mxu0 %v1604
        %v1672 = vpop.f32.mrb[0].mxu0
        %v1673 = vadd.f32 0.0, %v1672
        %v1674 = vpop.f32.mrb[0].mxu0
        %1675 = vdwg.mxu0
        %1676 = vrot.lane.b32.xlu0 %v464, 120
        %v1677 = vpop.permute.xlu0 %1676
        %v1680 = vsel %vm1435, %v1518, 0
        %1682 = vmatprep.subr.mxu0 0.0
        %1683 = vmatpush1.msra.mxu0 %v1677
        %1684 = vmatprep.subr.mxu0 0.0
        %1685 = vmatpush1.msra.mxu0 0.0
        %1686 = vmatprep.subr.mxu0 0.0
        %1687 = vmatpush1.msra.mxu0 0.0
        %1688 = vmatprep.subr.mxu0 0.0
        %1689 = vmatpush1.msra.mxu0 0.0
        %1690 = vmatprep.subr.mxu0 0.0
        %1691 = vmatpush1.msra.mxu0 0.0
        %1692 = vmatprep.subr.mxu0 0.0
        %1693 = vmatpush1.msra.mxu0 0.0
        %1694 = vmatprep.subr.mxu0 0.0
        %1695 = vmatpush1.msra.mxu0 0.0
        %1696 = vmatprep.subr.mxu0 0.0
        %1697 = vmatpush1.msra.mxu0 0.0
        %1698 = vmatprep.subr.mxu0 0.0
        %1699 = vmatpush1.msra.mxu0 0.0
        %1700 = vmatprep.subr.mxu0 0.0
        %1701 = vmatpush1.msra.mxu0 0.0
        %1702 = vmatprep.subr.mxu0 0.0
        %1703 = vmatpush1.msra.mxu0 0.0
        %1704 = vmatprep.subr.mxu0 0.0
        %1705 = vmatpush1.msra.mxu0 0.0
        %1706 = vmatprep.subr.mxu0 0.0
        %1707 = vmatpush1.msra.mxu0 0.0
        %1708 = vmatprep.subr.mxu0 0.0
        %1709 = vmatpush1.msra.mxu0 0.0
        %1710 = vmatprep.subr.mxu0 0.0
        %1711 = vmatpush1.msra.mxu0 0.0
        %1712 = vmatprep.subr.mxu0 0.0
        %1713 = vmatpush1.msra.mxu0 0.0
        %1714 = vmatprep.subr.mxu0 0.0
        %1715 = vmatpush1.msra.mxu0 0.0
        %1716 = vmatprep.subr.mxu0 0.0
        %1717 = vmatpush1.msra.mxu0 0.0
        %1718 = vmatprep.subr.mxu0 0.0
        %1719 = vmatpush1.msra.mxu0 0.0
        %1720 = vmatprep.subr.mxu0 0.0
        %1721 = vmatpush1.msra.mxu0 0.0
        %1722 = vmatprep.subr.mxu0 0.0
        %1723 = vmatpush1.msra.mxu0 0.0
        %1724 = vmatprep.subr.mxu0 0.0
        %1725 = vmatpush1.msra.mxu0 0.0
        %1726 = vmatprep.subr.mxu0 0.0
        %1727 = vmatpush1.msra.mxu0 0.0
        %1728 = vmatprep.subr.mxu0 0.0
        %1729 = vmatpush1.msra.mxu0 0.0
        %1730 = vmatprep.subr.mxu0 0.0
        %1731 = vmatpush1.msra.mxu0 0.0
        %1732 = vmatprep.subr.mxu0 0.0
        %1733 = vmatpush1.msra.mxu0 0.0
        %1734 = vmatprep.subr.mxu0 0.0
        %1735 = vmatpush1.msra.mxu0 0.0
        %1736 = vmatprep.subr.mxu0 0.0
        %1737 = vmatpush1.msra.mxu0 0.0
        %1738 = vmatprep.subr.mxu0 0.0
        %1739 = vmatpush1.msra.mxu0 0.0
        %1740 = vmatprep.subr.mxu0 0.0
        %1741 = vmatpush1.msra.mxu0 0.0
        %1742 = vmatprep.subr.mxu0 0.0
        %1743 = vmatpush1.msra.mxu0 0.0
        %1744 = vmatprep.subr.mxu0 0.0
        %1745 = vmatpush1.msra.mxu0 0.0
        %1746 = vmatprep.mubr.f32.mxu0 0.0
        %1747 = vmatmul.mubr.f32.gmra.mrb[0].mxu0 %v1680
        %v1748 = vpop.f32.mrb[0].mxu0
        %v1749 = vadd.f32 0.0, %v1748
        %v1750 = vpop.f32.mrb[0].mxu0
        %1751 = vdwg.mxu0
        %1752 = vrot.lane.b32.xlu0 %v534, 120
        %v1753 = vpop.permute.xlu0 %1752
        %v1756 = vsel %vm1435, %v1519, 0
        %1758 = vmatprep.subr.mxu0 0.0
        %1759 = vmatpush1.msra.mxu0 %v1753
        %1760 = vmatprep.subr.mxu0 0.0
        %1761 = vmatpush1.msra.mxu0 0.0
        %1762 = vmatprep.subr.mxu0 0.0
        %1763 = vmatpush1.msra.mxu0 0.0
        %1764 = vmatprep.subr.mxu0 0.0
        %1765 = vmatpush1.msra.mxu0 0.0
        %1766 = vmatprep.subr.mxu0 0.0
        %1767 = vmatpush1.msra.mxu0 0.0
        %1768 = vmatprep.subr.mxu0 0.0
        %1769 = vmatpush1.msra.mxu0 0.0
        %1770 = vmatprep.subr.mxu0 0.0
        %1771 = vmatpush1.msra.mxu0 0.0
        %1772 = vmatprep.subr.mxu0 0.0
        %1773 = vmatpush1.msra.mxu0 0.0
        %1774 = vmatprep.subr.mxu0 0.0
        %1775 = vmatpush1.msra.mxu0 0.0
        %1776 = vmatprep.subr.mxu0 0.0
        %1777 = vmatpush1.msra.mxu0 0.0
        %1778 = vmatprep.subr.mxu0 0.0
        %1779 = vmatpush1.msra.mxu0 0.0
        %1780 = vmatprep.subr.mxu0 0.0
        %1781 = vmatpush1.msra.mxu0 0.0
        %1782 = vmatprep.subr.mxu0 0.0
        %1783 = vmatpush1.msra.mxu0 0.0
        %1784 = vmatprep.subr.mxu0 0.0
        %1785 = vmatpush1.msra.mxu0 0.0
        %1786 = vmatprep.subr.mxu0 0.0
        %1787 = vmatpush1.msra.mxu0 0.0
        %1788 = vmatprep.subr.mxu0 0.0
        %1789 = vmatpush1.msra.mxu0 0.0
        %1790 = vmatprep.subr.mxu0 0.0
        %1791 = vmatpush1.msra.mxu0 0.0
        %1792 = vmatprep.subr.mxu0 0.0
        %1793 = vmatpush1.msra.mxu0 0.0
        %1794 = vmatprep.subr.mxu0 0.0
        %1795 = vmatpush1.msra.mxu0 0.0
        %1796 = vmatprep.subr.mxu0 0.0
        %1797 = vmatpush1.msra.mxu0 0.0
        %1798 = vmatprep.subr.mxu0 0.0
        %1799 = vmatpush1.msra.mxu0 0.0
        %1800 = vmatprep.subr.mxu0 0.0
        %1801 = vmatpush1.msra.mxu0 0.0
        %1802 = vmatprep.subr.mxu0 0.0
        %1803 = vmatpush1.msra.mxu0 0.0
        %1804 = vmatprep.subr.mxu0 0.0
        %1805 = vmatpush1.msra.mxu0 0.0
        %1806 = vmatprep.subr.mxu0 0.0
        %1807 = vmatpush1.msra.mxu0 0.0
        %1808 = vmatprep.subr.mxu0 0.0
        %1809 = vmatpush1.msra.mxu0 0.0
        %1810 = vmatprep.subr.mxu0 0.0
        %1811 = vmatpush1.msra.mxu0 0.0
        %1812 = vmatprep.subr.mxu0 0.0
        %1813 = vmatpush1.msra.mxu0 0.0
        %1814 = vmatprep.subr.mxu0 0.0
        %1815 = vmatpush1.msra.mxu0 0.0
        %1816 = vmatprep.subr.mxu0 0.0
        %1817 = vmatpush1.msra.mxu0 0.0
        %1818 = vmatprep.subr.mxu0 0.0
        %1819 = vmatpush1.msra.mxu0 0.0
        %1820 = vmatprep.subr.mxu0 0.0
        %1821 = vmatpush1.msra.mxu0 0.0
        %1822 = vmatprep.mubr.f32.mxu0 0.0
        %1823 = vmatmul.mubr.f32.gmra.mrb[0].mxu0 %v1756
        %v1824 = vpop.f32.mrb[0].mxu0
        %v1825 = vadd.f32 0.0, %v1824
        %v1826 = vpop.f32.mrb[0].mxu0
        %1827 = vdwg.mxu0
        %1828 = vrot.lane.b32.xlu0 %v604, 120
        %v1829 = vpop.permute.xlu0 %1828
        %v1832 = vsel %vm1435, %v1520, 0
        %1834 = vmatprep.subr.mxu0 0.0
        %1835 = vmatpush1.msra.mxu0 %v1829
        %1836 = vmatprep.subr.mxu0 0.0
        %1837 = vmatpush1.msra.mxu0 0.0
        %1838 = vmatprep.subr.mxu0 0.0
        %1839 = vmatpush1.msra.mxu0 0.0
        %1840 = vmatprep.subr.mxu0 0.0
        %1841 = vmatpush1.msra.mxu0 0.0
        %1842 = vmatprep.subr.mxu0 0.0
        %1843 = vmatpush1.msra.mxu0 0.0
        %1844 = vmatprep.subr.mxu0 0.0
        %1845 = vmatpush1.msra.mxu0 0.0
        %1846 = vmatprep.subr.mxu0 0.0
        %1847 = vmatpush1.msra.mxu0 0.0
        %1848 = vmatprep.subr.mxu0 0.0
        %1849 = vmatpush1.msra.mxu0 0.0
        %1850 = vmatprep.subr.mxu0 0.0
        %1851 = vmatpush1.msra.mxu0 0.0
        %1852 = vmatprep.subr.mxu0 0.0
        %1853 = vmatpush1.msra.mxu0 0.0
        %1854 = vmatprep.subr.mxu0 0.0
        %1855 = vmatpush1.msra.mxu0 0.0
        %1856 = vmatprep.subr.mxu0 0.0
        %1857 = vmatpush1.msra.mxu0 0.0
        %1858 = vmatprep.subr.mxu0 0.0
        %1859 = vmatpush1.msra.mxu0 0.0
        %1860 = vmatprep.subr.mxu0 0.0
        %1861 = vmatpush1.msra.mxu0 0.0
        %1862 = vmatprep.subr.mxu0 0.0
        %1863 = vmatpush1.msra.mxu0 0.0
        %1864 = vmatprep.subr.mxu0 0.0
        %1865 = vmatpush1.msra.mxu0 0.0
        %1866 = vmatprep.subr.mxu0 0.0
        %1867 = vmatpush1.msra.mxu0 0.0
        %1868 = vmatprep.subr.mxu0 0.0
        %1869 = vmatpush1.msra.mxu0 0.0
        %1870 = vmatprep.subr.mxu0 0.0
        %1871 = vmatpush1.msra.mxu0 0.0
        %1872 = vmatprep.subr.mxu0 0.0
        %1873 = vmatpush1.msra.mxu0 0.0
        %1874 = vmatprep.subr.mxu0 0.0
        %1875 = vmatpush1.msra.mxu0 0.0
        %1876 = vmatprep.subr.mxu0 0.0
        %1877 = vmatpush1.msra.mxu0 0.0
        %1878 = vmatprep.subr.mxu0 0.0
        %1879 = vmatpush1.msra.mxu0 0.0
        %1880 = vmatprep.subr.mxu0 0.0
        %1881 = vmatpush1.msra.mxu0 0.0
        %1882 = vmatprep.subr.mxu0 0.0
        %1883 = vmatpush1.msra.mxu0 0.0
        %1884 = vmatprep.subr.mxu0 0.0
        %1885 = vmatpush1.msra.mxu0 0.0
        %1886 = vmatprep.subr.mxu0 0.0
        %1887 = vmatpush1.msra.mxu0 0.0
        %1888 = vmatprep.subr.mxu0 0.0
        %1889 = vmatpush1.msra.mxu0 0.0
        %1890 = vmatprep.subr.mxu0 0.0
        %1891 = vmatpush1.msra.mxu0 0.0
        %1892 = vmatprep.subr.mxu0 0.0
        %1893 = vmatpush1.msra.mxu0 0.0
        %1894 = vmatprep.subr.mxu0 0.0
        %1895 = vmatpush1.msra.mxu0 0.0
        %1896 = vmatprep.subr.mxu0 0.0
        %1897 = vmatpush1.msra.mxu0 0.0
        %1898 = vmatprep.mubr.f32.mxu0 0.0
        %1899 = vmatmul.mubr.f32.gmra.mrb[0].mxu0 %v1832
        %v1900 = vpop.f32.mrb[0].mxu0
        %v1901 = vadd.f32 0.0, %v1900
        %v1902 = vpop.f32.mrb[0].mxu0
        %1903 = vdwg.mxu0
        %1904 = vrot.lane.b32.xlu0 %v674, 120
        %v1905 = vpop.permute.xlu0 %1904
        %v1908 = vsel %vm1435, %v1521, 0
        %1910 = vmatprep.subr.mxu0 0.0
        %1911 = vmatpush1.msra.mxu0 %v1905
        %1912 = vmatprep.subr.mxu0 0.0
        %1913 = vmatpush1.msra.mxu0 0.0
        %1914 = vmatprep.subr.mxu0 0.0
        %1915 = vmatpush1.msra.mxu0 0.0
        %1916 = vmatprep.subr.mxu0 0.0
        %1917 = vmatpush1.msra.mxu0 0.0
        %1918 = vmatprep.subr.mxu0 0.0
        %1919 = vmatpush1.msra.mxu0 0.0
        %1920 = vmatprep.subr.mxu0 0.0
        %1921 = vmatpush1.msra.mxu0 0.0
        %1922 = vmatprep.subr.mxu0 0.0
        %1923 = vmatpush1.msra.mxu0 0.0
        %1924 = vmatprep.subr.mxu0 0.0
        %1925 = vmatpush1.msra.mxu0 0.0
        %1926 = vmatprep.subr.mxu0 0.0
        %1927 = vmatpush1.msra.mxu0 0.0
        %1928 = vmatprep.subr.mxu0 0.0
        %1929 = vmatpush1.msra.mxu0 0.0
        %1930 = vmatprep.subr.mxu0 0.0
        %1931 = vmatpush1.msra.mxu0 0.0
        %1932 = vmatprep.subr.mxu0 0.0
        %1933 = vmatpush1.msra.mxu0 0.0
        %1934 = vmatprep.subr.mxu0 0.0
        %1935 = vmatpush1.msra.mxu0 0.0
        %1936 = vmatprep.subr.mxu0 0.0
        %1937 = vmatpush1.msra.mxu0 0.0
        %1938 = vmatprep.subr.mxu0 0.0
        %1939 = vmatpush1.msra.mxu0 0.0
        %1940 = vmatprep.subr.mxu0 0.0
        %1941 = vmatpush1.msra.mxu0 0.0
        %1942 = vmatprep.subr.mxu0 0.0
        %1943 = vmatpush1.msra.mxu0 0.0
        %1944 = vmatprep.subr.mxu0 0.0
        %1945 = vmatpush1.msra.mxu0 0.0
        %1946 = vmatprep.subr.mxu0 0.0
        %1947 = vmatpush1.msra.mxu0 0.0
        %1948 = vmatprep.subr.mxu0 0.0
        %1949 = vmatpush1.msra.mxu0 0.0
        %1950 = vmatprep.subr.mxu0 0.0
        %1951 = vmatpush1.msra.mxu0 0.0
        %1952 = vmatprep.subr.mxu0 0.0
        %1953 = vmatpush1.msra.mxu0 0.0
        %1954 = vmatprep.subr.mxu0 0.0
        %1955 = vmatpush1.msra.mxu0 0.0
        %1956 = vmatprep.subr.mxu0 0.0
        %1957 = vmatpush1.msra.mxu0 0.0
        %1958 = vmatprep.subr.mxu0 0.0
        %1959 = vmatpush1.msra.mxu0 0.0
        %1960 = vmatprep.subr.mxu0 0.0
        %1961 = vmatpush1.msra.mxu0 0.0
        %1962 = vmatprep.subr.mxu0 0.0
        %1963 = vmatpush1.msra.mxu0 0.0
        %1964 = vmatprep.subr.mxu0 0.0
        %1965 = vmatpush1.msra.mxu0 0.0
        %1966 = vmatprep.subr.mxu0 0.0
        %1967 = vmatpush1.msra.mxu0 0.0
        %1968 = vmatprep.subr.mxu0 0.0
        %1969 = vmatpush1.msra.mxu0 0.0
        %1970 = vmatprep.subr.mxu0 0.0
        %1971 = vmatpush1.msra.mxu0 0.0
        %1972 = vmatprep.subr.mxu0 0.0
        %1973 = vmatpush1.msra.mxu0 0.0
        %1974 = vmatprep.mubr.f32.mxu0 0.0
        %1975 = vmatmul.mubr.f32.gmra.mrb[0].mxu0 %v1908
        %v1976 = vpop.f32.mrb[0].mxu0
        %v1977 = vadd.f32 0.0, %v1976
        %v1978 = vpop.f32.mrb[0].mxu0
        %1979 = vdwg.mxu0
        %1980 = vrot.lane.b32.xlu0 %v744, 120
        %v1981 = vpop.permute.xlu0 %1980
        %v1984 = vsel %vm1435, %v1522, 0
        %1986 = vmatprep.subr.mxu0 0.0
        %1987 = vmatpush1.msra.mxu0 %v1981
        %1988 = vmatprep.subr.mxu0 0.0
        %1989 = vmatpush1.msra.mxu0 0.0
        %1990 = vmatprep.subr.mxu0 0.0
        %1991 = vmatpush1.msra.mxu0 0.0
        %1992 = vmatprep.subr.mxu0 0.0
        %1993 = vmatpush1.msra.mxu0 0.0
        %1994 = vmatprep.subr.mxu0 0.0
        %1995 = vmatpush1.msra.mxu0 0.0
        %1996 = vmatprep.subr.mxu0 0.0
        %1997 = vmatpush1.msra.mxu0 0.0
        %1998 = vmatprep.subr.mxu0 0.0
        %1999 = vmatpush1.msra.mxu0 0.0
        %2000 = vmatprep.subr.mxu0 0.0
        %2001 = vmatpush1.msra.mxu0 0.0
        %2002 = vmatprep.subr.mxu0 0.0
        %2003 = vmatpush1.msra.mxu0 0.0
        %2004 = vmatprep.subr.mxu0 0.0
        %2005 = vmatpush1.msra.mxu0 0.0
        %2006 = vmatprep.subr.mxu0 0.0
        %2007 = vmatpush1.msra.mxu0 0.0
        %2008 = vmatprep.subr.mxu0 0.0
        %2009 = vmatpush1.msra.mxu0 0.0
        %2010 = vmatprep.subr.mxu0 0.0
        %2011 = vmatpush1.msra.mxu0 0.0
        %2012 = vmatprep.subr.mxu0 0.0
        %2013 = vmatpush1.msra.mxu0 0.0
        %2014 = vmatprep.subr.mxu0 0.0
        %2015 = vmatpush1.msra.mxu0 0.0
        %2016 = vmatprep.subr.mxu0 0.0
        %2017 = vmatpush1.msra.mxu0 0.0
        %2018 = vmatprep.subr.mxu0 0.0
        %2019 = vmatpush1.msra.mxu0 0.0
        %2020 = vmatprep.subr.mxu0 0.0
        %2021 = vmatpush1.msra.mxu0 0.0
        %2022 = vmatprep.subr.mxu0 0.0
        %2023 = vmatpush1.msra.mxu0 0.0
        %2024 = vmatprep.subr.mxu0 0.0
        %2025 = vmatpush1.msra.mxu0 0.0
        %2026 = vmatprep.subr.mxu0 0.0
        %2027 = vmatpush1.msra.mxu0 0.0
        %2028 = vmatprep.subr.mxu0 0.0
        %2029 = vmatpush1.msra.mxu0 0.0
        %2030 = vmatprep.subr.mxu0 0.0
        %2031 = vmatpush1.msra.mxu0 0.0
        %2032 = vmatprep.subr.mxu0 0.0
        %2033 = vmatpush1.msra.mxu0 0.0
        %2034 = vmatprep.subr.mxu0 0.0
        %2035 = vmatpush1.msra.mxu0 0.0
        %2036 = vmatprep.subr.mxu0 0.0
        %2037 = vmatpush1.msra.mxu0 0.0
        %2038 = vmatprep.subr.mxu0 0.0
        %2039 = vmatpush1.msra.mxu0 0.0
        %2040 = vmatprep.subr.mxu0 0.0
        %2041 = vmatpush1.msra.mxu0 0.0
        %2042 = vmatprep.subr.mxu0 0.0
        %2043 = vmatpush1.msra.mxu0 0.0
        %2044 = vmatprep.subr.mxu0 0.0
        %2045 = vmatpush1.msra.mxu0 0.0
        %2046 = vmatprep.subr.mxu0 0.0
        %2047 = vmatpush1.msra.mxu0 0.0
        %2048 = vmatprep.subr.mxu0 0.0
        %2049 = vmatpush1.msra.mxu0 0.0
        %2050 = vmatprep.mubr.f32.mxu0 0.0
        %2051 = vmatmul.mubr.f32.gmra.mrb[0].mxu0 %v1984
        %v2052 = vpop.f32.mrb[0].mxu0
        %v2053 = vadd.f32 0.0, %v2052
        %v2054 = vpop.f32.mrb[0].mxu0
        %2055 = vdwg.mxu0
        %2056 = vrot.lane.b32.xlu0 %v814, 120
        %v2057 = vpop.permute.xlu0 %2056
        %v2060 = vsel %vm1435, %v1523, 0
        %2062 = vmatprep.subr.mxu0 0.0
        %2063 = vmatpush1.msra.mxu0 %v2057
        %2064 = vmatprep.subr.mxu0 0.0
        %2065 = vmatpush1.msra.mxu0 0.0
        %2066 = vmatprep.subr.mxu0 0.0
        %2067 = vmatpush1.msra.mxu0 0.0
        %2068 = vmatprep.subr.mxu0 0.0
        %2069 = vmatpush1.msra.mxu0 0.0
        %2070 = vmatprep.subr.mxu0 0.0
        %2071 = vmatpush1.msra.mxu0 0.0
        %2072 = vmatprep.subr.mxu0 0.0
        %2073 = vmatpush1.msra.mxu0 0.0
        %2074 = vmatprep.subr.mxu0 0.0
        %2075 = vmatpush1.msra.mxu0 0.0
        %2076 = vmatprep.subr.mxu0 0.0
        %2077 = vmatpush1.msra.mxu0 0.0
        %2078 = vmatprep.subr.mxu0 0.0
        %2079 = vmatpush1.msra.mxu0 0.0
        %2080 = vmatprep.subr.mxu0 0.0
        %2081 = vmatpush1.msra.mxu0 0.0
        %2082 = vmatprep.subr.mxu0 0.0
        %2083 = vmatpush1.msra.mxu0 0.0
        %2084 = vmatprep.subr.mxu0 0.0
        %2085 = vmatpush1.msra.mxu0 0.0
        %2086 = vmatprep.subr.mxu0 0.0
        %2087 = vmatpush1.msra.mxu0 0.0
        %2088 = vmatprep.subr.mxu0 0.0
        %2089 = vmatpush1.msra.mxu0 0.0
        %2090 = vmatprep.subr.mxu0 0.0
        %2091 = vmatpush1.msra.mxu0 0.0
        %2092 = vmatprep.subr.mxu0 0.0
        %2093 = vmatpush1.msra.mxu0 0.0
        %2094 = vmatprep.subr.mxu0 0.0
        %2095 = vmatpush1.msra.mxu0 0.0
        %2096 = vmatprep.subr.mxu0 0.0
        %2097 = vmatpush1.msra.mxu0 0.0
        %2098 = vmatprep.subr.mxu0 0.0
        %2099 = vmatpush1.msra.mxu0 0.0
        %2100 = vmatprep.subr.mxu0 0.0
        %2101 = vmatpush1.msra.mxu0 0.0
        %2102 = vmatprep.subr.mxu0 0.0
        %2103 = vmatpush1.msra.mxu0 0.0
        %2104 = vmatprep.subr.mxu0 0.0
        %2105 = vmatpush1.msra.mxu0 0.0
        %2106 = vmatprep.subr.mxu0 0.0
        %2107 = vmatpush1.msra.mxu0 0.0
        %2108 = vmatprep.subr.mxu0 0.0
        %2109 = vmatpush1.msra.mxu0 0.0
        %2110 = vmatprep.subr.mxu0 0.0
        %2111 = vmatpush1.msra.mxu0 0.0
        %2112 = vmatprep.subr.mxu0 0.0
        %2113 = vmatpush1.msra.mxu0 0.0
        %2114 = vmatprep.subr.mxu0 0.0
        %2115 = vmatpush1.msra.mxu0 0.0
        %2116 = vmatprep.subr.mxu0 0.0
        %2117 = vmatpush1.msra.mxu0 0.0
        %2118 = vmatprep.subr.mxu0 0.0
        %2119 = vmatpush1.msra.mxu0 0.0
        %2120 = vmatprep.subr.mxu0 0.0
        %2121 = vmatpush1.msra.mxu0 0.0
        %2122 = vmatprep.subr.mxu0 0.0
        %2123 = vmatpush1.msra.mxu0 0.0
        %2124 = vmatprep.subr.mxu0 0.0
        %2125 = vmatpush1.msra.mxu0 0.0
        %2126 = vmatprep.mubr.f32.mxu0 0.0
        %2127 = vmatmul.mubr.f32.gmra.mrb[0].mxu0 %v2060
        %v2128 = vpop.f32.mrb[0].mxu0
        %v2129 = vadd.f32 0.0, %v2128
        %v2130 = vpop.f32.mrb[0].mxu0
        %2131 = vdwg.mxu0
        %v2132 = vld [vmem:[%s3] sm:$0xf]
        %v2133 = vld [vmem:[%s3 + $0x4] sm:$0xf]
        %v2134 = vld [vmem:[%s3 + $0x8] sm:$0xf]
        %v2135 = vld [vmem:[%s3 + $0xc] sm:$0xf]
        %v2136 = vld [vmem:[%s3 + $0x10] sm:$0xf]
        %v2137 = vld [vmem:[%s3 + $0x14] sm:$0xf]
        %v2138 = vld [vmem:[%s3 + $0x18] sm:$0xf]
        %v2139 = vld [vmem:[%s3 + $0x1c] sm:$0xf]
        %v2141 = vsel %vm821, %v1597, 0
        %vm2143 = vcmask 1043456
        %v2145 = vsel %vm2143, %v2132, 0
        %2147 = vmatprep.subr.mxu0 0.0
        %2148 = vmatpush1.msra.mxu0 %v2145
        %2149 = vmatprep.subr.mxu0 0.0
        %2150 = vmatpush1.msra.mxu0 0.0
        %2151 = vmatprep.subr.mxu0 0.0
        %2152 = vmatpush1.msra.mxu0 0.0
        %2153 = vmatprep.subr.mxu0 0.0
        %2154 = vmatpush1.msra.mxu0 0.0
        %2155 = vmatprep.subr.mxu0 0.0
        %2156 = vmatpush1.msra.mxu0 0.0
        %2157 = vmatprep.subr.mxu0 0.0
        %2158 = vmatpush1.msra.mxu0 0.0
        %2159 = vmatprep.subr.mxu0 0.0
        %2160 = vmatpush1.msra.mxu0 0.0
        %2161 = vmatprep.subr.mxu0 0.0
        %2162 = vmatpush1.msra.mxu0 0.0
        %2163 = vmatprep.subr.mxu0 0.0
        %2164 = vmatpush1.msra.mxu0 0.0
        %2165 = vmatprep.subr.mxu0 0.0
        %2166 = vmatpush1.msra.mxu0 0.0
        %2167 = vmatprep.subr.mxu0 0.0
        %2168 = vmatpush1.msra.mxu0 0.0
        %2169 = vmatprep.subr.mxu0 0.0
        %2170 = vmatpush1.msra.mxu0 0.0
        %2171 = vmatprep.subr.mxu0 0.0
        %2172 = vmatpush1.msra.mxu0 0.0
        %2173 = vmatprep.subr.mxu0 0.0
        %2174 = vmatpush1.msra.mxu0 0.0
        %2175 = vmatprep.subr.mxu0 0.0
        %2176 = vmatpush1.msra.mxu0 0.0
        %2177 = vmatprep.subr.mxu0 0.0
        %2178 = vmatpush1.msra.mxu0 0.0
        %2179 = vmatprep.subr.mxu0 0.0
        %2180 = vmatpush1.msra.mxu0 0.0
        %2181 = vmatprep.subr.mxu0 0.0
        %2182 = vmatpush1.msra.mxu0 0.0
        %2183 = vmatprep.subr.mxu0 0.0
        %2184 = vmatpush1.msra.mxu0 0.0
        %2185 = vmatprep.subr.mxu0 0.0
        %2186 = vmatpush1.msra.mxu0 0.0
        %2187 = vmatprep.subr.mxu0 0.0
        %2188 = vmatpush1.msra.mxu0 0.0
        %2189 = vmatprep.subr.mxu0 0.0
        %2190 = vmatpush1.msra.mxu0 0.0
        %2191 = vmatprep.subr.mxu0 0.0
        %2192 = vmatpush1.msra.mxu0 0.0
        %2193 = vmatprep.subr.mxu0 0.0
        %2194 = vmatpush1.msra.mxu0 0.0
        %2195 = vmatprep.subr.mxu0 0.0
        %2196 = vmatpush1.msra.mxu0 0.0
        %2197 = vmatprep.subr.mxu0 0.0
        %2198 = vmatpush1.msra.mxu0 0.0
        %2199 = vmatprep.subr.mxu0 0.0
        %2200 = vmatpush1.msra.mxu0 0.0
        %2201 = vmatprep.subr.mxu0 0.0
        %2202 = vmatpush1.msra.mxu0 0.0
        %2203 = vmatprep.subr.mxu0 0.0
        %2204 = vmatpush1.msra.mxu0 0.0
        %2205 = vmatprep.subr.mxu0 0.0
        %2206 = vmatpush1.msra.mxu0 0.0
        %2207 = vmatprep.subr.mxu0 0.0
        %2208 = vmatpush1.msra.mxu0 0.0
        %2209 = vmatprep.subr.mxu0 0.0
        %2210 = vmatpush1.msra.mxu0 0.0
        %2211 = vmatprep.mubr.f32.mxu0 0.0
        %2212 = vmatmul.mubr.f32.gmra.mrb[0].mxu0 %v2141
        %v2213 = vpop.f32.mrb[0].mxu0
        %v2214 = vadd.f32 0.0, %v2213
        %v2215 = vpop.f32.mrb[0].mxu0
        %2216 = vdwg.mxu0
        %v2218 = vsel %vm821, %v1673, 0
        %v2221 = vsel %vm2143, %v2133, 0
        %2223 = vmatprep.subr.mxu0 0.0
        %2224 = vmatpush1.msra.mxu0 %v2221
        %2225 = vmatprep.subr.mxu0 0.0
        %2226 = vmatpush1.msra.mxu0 0.0
        %2227 = vmatprep.subr.mxu0 0.0
        %2228 = vmatpush1.msra.mxu0 0.0
        %2229 = vmatprep.subr.mxu0 0.0
        %2230 = vmatpush1.msra.mxu0 0.0
        %2231 = vmatprep.subr.mxu0 0.0
        %2232 = vmatpush1.msra.mxu0 0.0
        %2233 = vmatprep.subr.mxu0 0.0
        %2234 = vmatpush1.msra.mxu0 0.0
        %2235 = vmatprep.subr.mxu0 0.0
        %2236 = vmatpush1.msra.mxu0 0.0
        %2237 = vmatprep.subr.mxu0 0.0
        %2238 = vmatpush1.msra.mxu0 0.0
        %2239 = vmatprep.subr.mxu0 0.0
        %2240 = vmatpush1.msra.mxu0 0.0
        %2241 = vmatprep.subr.mxu0 0.0
        %2242 = vmatpush1.msra.mxu0 0.0
        %2243 = vmatprep.subr.mxu0 0.0
        %2244 = vmatpush1.msra.mxu0 0.0
        %2245 = vmatprep.subr.mxu0 0.0
        %2246 = vmatpush1.msra.mxu0 0.0
        %2247 = vmatprep.subr.mxu0 0.0
        %2248 = vmatpush1.msra.mxu0 0.0
        %2249 = vmatprep.subr.mxu0 0.0
        %2250 = vmatpush1.msra.mxu0 0.0
        %2251 = vmatprep.subr.mxu0 0.0
        %2252 = vmatpush1.msra.mxu0 0.0
        %2253 = vmatprep.subr.mxu0 0.0
        %2254 = vmatpush1.msra.mxu0 0.0
        %2255 = vmatprep.subr.mxu0 0.0
        %2256 = vmatpush1.msra.mxu0 0.0
        %2257 = vmatprep.subr.mxu0 0.0
        %2258 = vmatpush1.msra.mxu0 0.0
        %2259 = vmatprep.subr.mxu0 0.0
        %2260 = vmatpush1.msra.mxu0 0.0
        %2261 = vmatprep.subr.mxu0 0.0
        %2262 = vmatpush1.msra.mxu0 0.0
        %2263 = vmatprep.subr.mxu0 0.0
        %2264 = vmatpush1.msra.mxu0 0.0
        %2265 = vmatprep.subr.mxu0 0.0
        %2266 = vmatpush1.msra.mxu0 0.0
        %2267 = vmatprep.subr.mxu0 0.0
        %2268 = vmatpush1.msra.mxu0 0.0
        %2269 = vmatprep.subr.mxu0 0.0
        %2270 = vmatpush1.msra.mxu0 0.0
        %2271 = vmatprep.subr.mxu0 0.0
        %2272 = vmatpush1.msra.mxu0 0.0
        %2273 = vmatprep.subr.mxu0 0.0
        %2274 = vmatpush1.msra.mxu0 0.0
        %2275 = vmatprep.subr.mxu0 0.0
        %2276 = vmatpush1.msra.mxu0 0.0
        %2277 = vmatprep.subr.mxu0 0.0
        %2278 = vmatpush1.msra.mxu0 0.0
        %2279 = vmatprep.subr.mxu0 0.0
        %2280 = vmatpush1.msra.mxu0 0.0
        %2281 = vmatprep.subr.mxu0 0.0
        %2282 = vmatpush1.msra.mxu0 0.0
        %2283 = vmatprep.subr.mxu0 0.0
        %2284 = vmatpush1.msra.mxu0 0.0
        %2285 = vmatprep.subr.mxu0 0.0
        %2286 = vmatpush1.msra.mxu0 0.0
        %2287 = vmatprep.mubr.f32.mxu0 0.0
        %2288 = vmatmul.mubr.f32.gmra.mrb[0].mxu0 %v2218
        %v2289 = vpop.f32.mrb[0].mxu0
        %v2290 = vadd.f32 0.0, %v2289
        %v2291 = vpop.f32.mrb[0].mxu0
        %2292 = vdwg.mxu0
        %v2294 = vsel %vm821, %v1749, 0
        %v2297 = vsel %vm2143, %v2134, 0
        %2299 = vmatprep.subr.mxu0 0.0
        %2300 = vmatpush1.msra.mxu0 %v2297
        %2301 = vmatprep.subr.mxu0 0.0
        %2302 = vmatpush1.msra.mxu0 0.0
        %2303 = vmatprep.subr.mxu0 0.0
        %2304 = vmatpush1.msra.mxu0 0.0
        %2305 = vmatprep.subr.mxu0 0.0
        %2306 = vmatpush1.msra.mxu0 0.0
        %2307 = vmatprep.subr.mxu0 0.0
        %2308 = vmatpush1.msra.mxu0 0.0
        %2309 = vmatprep.subr.mxu0 0.0
        %2310 = vmatpush1.msra.mxu0 0.0
        %2311 = vmatprep.subr.mxu0 0.0
        %2312 = vmatpush1.msra.mxu0 0.0
        %2313 = vmatprep.subr.mxu0 0.0
        %2314 = vmatpush1.msra.mxu0 0.0
        %2315 = vmatprep.subr.mxu0 0.0
        %2316 = vmatpush1.msra.mxu0 0.0
        %2317 = vmatprep.subr.mxu0 0.0
        %2318 = vmatpush1.msra.mxu0 0.0
        %2319 = vmatprep.subr.mxu0 0.0
        %2320 = vmatpush1.msra.mxu0 0.0
        %2321 = vmatprep.subr.mxu0 0.0
        %2322 = vmatpush1.msra.mxu0 0.0
        %2323 = vmatprep.subr.mxu0 0.0
        %2324 = vmatpush1.msra.mxu0 0.0
        %2325 = vmatprep.subr.mxu0 0.0
        %2326 = vmatpush1.msra.mxu0 0.0
        %2327 = vmatprep.subr.mxu0 0.0
        %2328 = vmatpush1.msra.mxu0 0.0
        %2329 = vmatprep.subr.mxu0 0.0
        %2330 = vmatpush1.msra.mxu0 0.0
        %2331 = vmatprep.subr.mxu0 0.0
        %2332 = vmatpush1.msra.mxu0 0.0
        %2333 = vmatprep.subr.mxu0 0.0
        %2334 = vmatpush1.msra.mxu0 0.0
        %2335 = vmatprep.subr.mxu0 0.0
        %2336 = vmatpush1.msra.mxu0 0.0
        %2337 = vmatprep.subr.mxu0 0.0
        %2338 = vmatpush1.msra.mxu0 0.0
        %2339 = vmatprep.subr.mxu0 0.0
        %2340 = vmatpush1.msra.mxu0 0.0
        %2341 = vmatprep.subr.mxu0 0.0
        %2342 = vmatpush1.msra.mxu0 0.0
        %2343 = vmatprep.subr.mxu0 0.0
        %2344 = vmatpush1.msra.mxu0 0.0
        %2345 = vmatprep.subr.mxu0 0.0
        %2346 = vmatpush1.msra.mxu0 0.0
        %2347 = vmatprep.subr.mxu0 0.0
        %2348 = vmatpush1.msra.mxu0 0.0
        %2349 = vmatprep.subr.mxu0 0.0
        %2350 = vmatpush1.msra.mxu0 0.0
        %2351 = vmatprep.subr.mxu0 0.0
        %2352 = vmatpush1.msra.mxu0 0.0
        %2353 = vmatprep.subr.mxu0 0.0
        %2354 = vmatpush1.msra.mxu0 0.0
        %2355 = vmatprep.subr.mxu0 0.0
        %2356 = vmatpush1.msra.mxu0 0.0
        %2357 = vmatprep.subr.mxu0 0.0
        %2358 = vmatpush1.msra.mxu0 0.0
        %2359 = vmatprep.subr.mxu0 0.0
        %2360 = vmatpush1.msra.mxu0 0.0
        %2361 = vmatprep.subr.mxu0 0.0
        %2362 = vmatpush1.msra.mxu0 0.0
        %2363 = vmatprep.mubr.f32.mxu0 0.0
        %2364 = vmatmul.mubr.f32.gmra.mrb[0].mxu0 %v2294
        %v2365 = vpop.f32.mrb[0].mxu0
        %v2366 = vadd.f32 0.0, %v2365
        %v2367 = vpop.f32.mrb[0].mxu0
        %2368 = vdwg.mxu0
        %v2370 = vsel %vm821, %v1825, 0
        %v2373 = vsel %vm2143, %v2135, 0
        %2375 = vmatprep.subr.mxu0 0.0
        %2376 = vmatpush1.msra.mxu0 %v2373
        %2377 = vmatprep.subr.mxu0 0.0
        %2378 = vmatpush1.msra.mxu0 0.0
        %2379 = vmatprep.subr.mxu0 0.0
        %2380 = vmatpush1.msra.mxu0 0.0
        %2381 = vmatprep.subr.mxu0 0.0
        %2382 = vmatpush1.msra.mxu0 0.0
        %2383 = vmatprep.subr.mxu0 0.0
        %2384 = vmatpush1.msra.mxu0 0.0
        %2385 = vmatprep.subr.mxu0 0.0
        %2386 = vmatpush1.msra.mxu0 0.0
        %2387 = vmatprep.subr.mxu0 0.0
        %2388 = vmatpush1.msra.mxu0 0.0
        %2389 = vmatprep.subr.mxu0 0.0
        %2390 = vmatpush1.msra.mxu0 0.0
        %2391 = vmatprep.subr.mxu0 0.0
        %2392 = vmatpush1.msra.mxu0 0.0
        %2393 = vmatprep.subr.mxu0 0.0
        %2394 = vmatpush1.msra.mxu0 0.0
        %2395 = vmatprep.subr.mxu0 0.0
        %2396 = vmatpush1.msra.mxu0 0.0
        %2397 = vmatprep.subr.mxu0 0.0
        %2398 = vmatpush1.msra.mxu0 0.0
        %2399 = vmatprep.subr.mxu0 0.0
        %2400 = vmatpush1.msra.mxu0 0.0
        %2401 = vmatprep.subr.mxu0 0.0
        %2402 = vmatpush1.msra.mxu0 0.0
        %2403 = vmatprep.subr.mxu0 0.0
        %2404 = vmatpush1.msra.mxu0 0.0
        %2405 = vmatprep.subr.mxu0 0.0
        %2406 = vmatpush1.msra.mxu0 0.0
        %2407 = vmatprep.subr.mxu0 0.0
        %2408 = vmatpush1.msra.mxu0 0.0
        %2409 = vmatprep.subr.mxu0 0.0
        %2410 = vmatpush1.msra.mxu0 0.0
        %2411 = vmatprep.subr.mxu0 0.0
        %2412 = vmatpush1.msra.mxu0 0.0
        %2413 = vmatprep.subr.mxu0 0.0
        %2414 = vmatpush1.msra.mxu0 0.0
        %2415 = vmatprep.subr.mxu0 0.0
        %2416 = vmatpush1.msra.mxu0 0.0
        %2417 = vmatprep.subr.mxu0 0.0
        %2418 = vmatpush1.msra.mxu0 0.0
        %2419 = vmatprep.subr.mxu0 0.0
        %2420 = vmatpush1.msra.mxu0 0.0
        %2421 = vmatprep.subr.mxu0 0.0
        %2422 = vmatpush1.msra.mxu0 0.0
        %2423 = vmatprep.subr.mxu0 0.0
        %2424 = vmatpush1.msra.mxu0 0.0
        %2425 = vmatprep.subr.mxu0 0.0
        %2426 = vmatpush1.msra.mxu0 0.0
        %2427 = vmatprep.subr.mxu0 0.0
        %2428 = vmatpush1.msra.mxu0 0.0
        %2429 = vmatprep.subr.mxu0 0.0
        %2430 = vmatpush1.msra.mxu0 0.0
        %2431 = vmatprep.subr.mxu0 0.0
        %2432 = vmatpush1.msra.mxu0 0.0
        %2433 = vmatprep.subr.mxu0 0.0
        %2434 = vmatpush1.msra.mxu0 0.0
        %2435 = vmatprep.subr.mxu0 0.0
        %2436 = vmatpush1.msra.mxu0 0.0
        %2437 = vmatprep.subr.mxu0 0.0
        %2438 = vmatpush1.msra.mxu0 0.0
        %2439 = vmatprep.mubr.f32.mxu0 0.0
        %2440 = vmatmul.mubr.f32.gmra.mrb[0].mxu0 %v2370
        %v2441 = vpop.f32.mrb[0].mxu0
        %v2442 = vadd.f32 0.0, %v2441
        %v2443 = vpop.f32.mrb[0].mxu0
        %2444 = vdwg.mxu0
        %v2446 = vsel %vm821, %v1901, 0
        %v2449 = vsel %vm2143, %v2136, 0
        %2451 = vmatprep.subr.mxu0 0.0
        %2452 = vmatpush1.msra.mxu0 %v2449
        %2453 = vmatprep.subr.mxu0 0.0
        %2454 = vmatpush1.msra.mxu0 0.0
        %2455 = vmatprep.subr.mxu0 0.0
        %2456 = vmatpush1.msra.mxu0 0.0
        %2457 = vmatprep.subr.mxu0 0.0
        %2458 = vmatpush1.msra.mxu0 0.0
        %2459 = vmatprep.subr.mxu0 0.0
        %2460 = vmatpush1.msra.mxu0 0.0
        %2461 = vmatprep.subr.mxu0 0.0
        %2462 = vmatpush1.msra.mxu0 0.0
        %2463 = vmatprep.subr.mxu0 0.0
        %2464 = vmatpush1.msra.mxu0 0.0
        %2465 = vmatprep.subr.mxu0 0.0
        %2466 = vmatpush1.msra.mxu0 0.0
        %2467 = vmatprep.subr.mxu0 0.0
        %2468 = vmatpush1.msra.mxu0 0.0
        %2469 = vmatprep.subr.mxu0 0.0
        %2470 = vmatpush1.msra.mxu0 0.0
        %2471 = vmatprep.subr.mxu0 0.0
        %2472 = vmatpush1.msra.mxu0 0.0
        %2473 = vmatprep.subr.mxu0 0.0
        %2474 = vmatpush1.msra.mxu0 0.0
        %2475 = vmatprep.subr.mxu0 0.0
        %2476 = vmatpush1.msra.mxu0 0.0
        %2477 = vmatprep.subr.mxu0 0.0
        %2478 = vmatpush1.msra.mxu0 0.0
        %2479 = vmatprep.subr.mxu0 0.0
        %2480 = vmatpush1.msra.mxu0 0.0
        %2481 = vmatprep.subr.mxu0 0.0
        %2482 = vmatpush1.msra.mxu0 0.0
        %2483 = vmatprep.subr.mxu0 0.0
        %2484 = vmatpush1.msra.mxu0 0.0
        %2485 = vmatprep.subr.mxu0 0.0
        %2486 = vmatpush1.msra.mxu0 0.0
        %2487 = vmatprep.subr.mxu0 0.0
        %2488 = vmatpush1.msra.mxu0 0.0
        %2489 = vmatprep.subr.mxu0 0.0
        %2490 = vmatpush1.msra.mxu0 0.0
        %2491 = vmatprep.subr.mxu0 0.0
        %2492 = vmatpush1.msra.mxu0 0.0
        %2493 = vmatprep.subr.mxu0 0.0
        %2494 = vmatpush1.msra.mxu0 0.0
        %2495 = vmatprep.subr.mxu0 0.0
        %2496 = vmatpush1.msra.mxu0 0.0
        %2497 = vmatprep.subr.mxu0 0.0
        %2498 = vmatpush1.msra.mxu0 0.0
        %2499 = vmatprep.subr.mxu0 0.0
        %2500 = vmatpush1.msra.mxu0 0.0
        %2501 = vmatprep.subr.mxu0 0.0
        %2502 = vmatpush1.msra.mxu0 0.0
        %2503 = vmatprep.subr.mxu0 0.0
        %2504 = vmatpush1.msra.mxu0 0.0
        %2505 = vmatprep.subr.mxu0 0.0
        %2506 = vmatpush1.msra.mxu0 0.0
        %2507 = vmatprep.subr.mxu0 0.0
        %2508 = vmatpush1.msra.mxu0 0.0
        %2509 = vmatprep.subr.mxu0 0.0
        %2510 = vmatpush1.msra.mxu0 0.0
        %2511 = vmatprep.subr.mxu0 0.0
        %2512 = vmatpush1.msra.mxu0 0.0
        %2513 = vmatprep.subr.mxu0 0.0
        %2514 = vmatpush1.msra.mxu0 0.0
        %2515 = vmatprep.mubr.f32.mxu0 0.0
        %2516 = vmatmul.mubr.f32.gmra.mrb[0].mxu0 %v2446
        %v2517 = vpop.f32.mrb[0].mxu0
        %v2518 = vadd.f32 0.0, %v2517
        %v2519 = vpop.f32.mrb[0].mxu0
        %2520 = vdwg.mxu0
        %v2522 = vsel %vm821, %v1977, 0
        %v2525 = vsel %vm2143, %v2137, 0
        %2527 = vmatprep.subr.mxu0 0.0
        %2528 = vmatpush1.msra.mxu0 %v2525
        %2529 = vmatprep.subr.mxu0 0.0
        %2530 = vmatpush1.msra.mxu0 0.0
        %2531 = vmatprep.subr.mxu0 0.0
        %2532 = vmatpush1.msra.mxu0 0.0
        %2533 = vmatprep.subr.mxu0 0.0
        %2534 = vmatpush1.msra.mxu0 0.0
        %2535 = vmatprep.subr.mxu0 0.0
        %2536 = vmatpush1.msra.mxu0 0.0
        %2537 = vmatprep.subr.mxu0 0.0
        %2538 = vmatpush1.msra.mxu0 0.0
        %2539 = vmatprep.subr.mxu0 0.0
        %2540 = vmatpush1.msra.mxu0 0.0
        %2541 = vmatprep.subr.mxu0 0.0
        %2542 = vmatpush1.msra.mxu0 0.0
        %2543 = vmatprep.subr.mxu0 0.0
        %2544 = vmatpush1.msra.mxu0 0.0
        %2545 = vmatprep.subr.mxu0 0.0
        %2546 = vmatpush1.msra.mxu0 0.0
        %2547 = vmatprep.subr.mxu0 0.0
        %2548 = vmatpush1.msra.mxu0 0.0
        %2549 = vmatprep.subr.mxu0 0.0
        %2550 = vmatpush1.msra.mxu0 0.0
        %2551 = vmatprep.subr.mxu0 0.0
        %2552 = vmatpush1.msra.mxu0 0.0
        %2553 = vmatprep.subr.mxu0 0.0
        %2554 = vmatpush1.msra.mxu0 0.0
        %2555 = vmatprep.subr.mxu0 0.0
        %2556 = vmatpush1.msra.mxu0 0.0
        %2557 = vmatprep.subr.mxu0 0.0
        %2558 = vmatpush1.msra.mxu0 0.0
        %2559 = vmatprep.subr.mxu0 0.0
        %2560 = vmatpush1.msra.mxu0 0.0
        %2561 = vmatprep.subr.mxu0 0.0
        %2562 = vmatpush1.msra.mxu0 0.0
        %2563 = vmatprep.subr.mxu0 0.0
        %2564 = vmatpush1.msra.mxu0 0.0
        %2565 = vmatprep.subr.mxu0 0.0
        %2566 = vmatpush1.msra.mxu0 0.0
        %2567 = vmatprep.subr.mxu0 0.0
        %2568 = vmatpush1.msra.mxu0 0.0
        %2569 = vmatprep.subr.mxu0 0.0
        %2570 = vmatpush1.msra.mxu0 0.0
        %2571 = vmatprep.subr.mxu0 0.0
        %2572 = vmatpush1.msra.mxu0 0.0
        %2573 = vmatprep.subr.mxu0 0.0
        %2574 = vmatpush1.msra.mxu0 0.0
        %2575 = vmatprep.subr.mxu0 0.0
        %2576 = vmatpush1.msra.mxu0 0.0
        %2577 = vmatprep.subr.mxu0 0.0
        %2578 = vmatpush1.msra.mxu0 0.0
        %2579 = vmatprep.subr.mxu0 0.0
        %2580 = vmatpush1.msra.mxu0 0.0
        %2581 = vmatprep.subr.mxu0 0.0
        %2582 = vmatpush1.msra.mxu0 0.0
        %2583 = vmatprep.subr.mxu0 0.0
        %2584 = vmatpush1.msra.mxu0 0.0
        %2585 = vmatprep.subr.mxu0 0.0
        %2586 = vmatpush1.msra.mxu0 0.0
        %2587 = vmatprep.subr.mxu0 0.0
        %2588 = vmatpush1.msra.mxu0 0.0
        %2589 = vmatprep.subr.mxu0 0.0
        %2590 = vmatpush1.msra.mxu0 0.0
        %2591 = vmatprep.mubr.f32.mxu0 0.0
        %2592 = vmatmul.mubr.f32.gmra.mrb[0].mxu0 %v2522
        %v2593 = vpop.f32.mrb[0].mxu0
        %v2594 = vadd.f32 0.0, %v2593
        %v2595 = vpop.f32.mrb[0].mxu0
        %2596 = vdwg.mxu0
        %v2598 = vsel %vm821, %v2053, 0
        %v2601 = vsel %vm2143, %v2138, 0
        %2603 = vmatprep.subr.mxu0 0.0
        %2604 = vmatpush1.msra.mxu0 %v2601
        %2605 = vmatprep.subr.mxu0 0.0
        %2606 = vmatpush1.msra.mxu0 0.0
        %2607 = vmatprep.subr.mxu0 0.0
        %2608 = vmatpush1.msra.mxu0 0.0
        %2609 = vmatprep.subr.mxu0 0.0
        %2610 = vmatpush1.msra.mxu0 0.0
        %2611 = vmatprep.subr.mxu0 0.0
        %2612 = vmatpush1.msra.mxu0 0.0
        %2613 = vmatprep.subr.mxu0 0.0
        %2614 = vmatpush1.msra.mxu0 0.0
        %2615 = vmatprep.subr.mxu0 0.0
        %2616 = vmatpush1.msra.mxu0 0.0
        %2617 = vmatprep.subr.mxu0 0.0
        %2618 = vmatpush1.msra.mxu0 0.0
        %2619 = vmatprep.subr.mxu0 0.0
        %2620 = vmatpush1.msra.mxu0 0.0
        %2621 = vmatprep.subr.mxu0 0.0
        %2622 = vmatpush1.msra.mxu0 0.0
        %2623 = vmatprep.subr.mxu0 0.0
        %2624 = vmatpush1.msra.mxu0 0.0
        %2625 = vmatprep.subr.mxu0 0.0
        %2626 = vmatpush1.msra.mxu0 0.0
        %2627 = vmatprep.subr.mxu0 0.0
        %2628 = vmatpush1.msra.mxu0 0.0
        %2629 = vmatprep.subr.mxu0 0.0
        %2630 = vmatpush1.msra.mxu0 0.0
        %2631 = vmatprep.subr.mxu0 0.0
        %2632 = vmatpush1.msra.mxu0 0.0
        %2633 = vmatprep.subr.mxu0 0.0
        %2634 = vmatpush1.msra.mxu0 0.0
        %2635 = vmatprep.subr.mxu0 0.0
        %2636 = vmatpush1.msra.mxu0 0.0
        %2637 = vmatprep.subr.mxu0 0.0
        %2638 = vmatpush1.msra.mxu0 0.0
        %2639 = vmatprep.subr.mxu0 0.0
        %2640 = vmatpush1.msra.mxu0 0.0
        %2641 = vmatprep.subr.mxu0 0.0
        %2642 = vmatpush1.msra.mxu0 0.0
        %2643 = vmatprep.subr.mxu0 0.0
        %2644 = vmatpush1.msra.mxu0 0.0
        %2645 = vmatprep.subr.mxu0 0.0
        %2646 = vmatpush1.msra.mxu0 0.0
        %2647 = vmatprep.subr.mxu0 0.0
        %2648 = vmatpush1.msra.mxu0 0.0
        %2649 = vmatprep.subr.mxu0 0.0
        %2650 = vmatpush1.msra.mxu0 0.0
        %2651 = vmatprep.subr.mxu0 0.0
        %2652 = vmatpush1.msra.mxu0 0.0
        %2653 = vmatprep.subr.mxu0 0.0
        %2654 = vmatpush1.msra.mxu0 0.0
        %2655 = vmatprep.subr.mxu0 0.0
        %2656 = vmatpush1.msra.mxu0 0.0
        %2657 = vmatprep.subr.mxu0 0.0
        %2658 = vmatpush1.msra.mxu0 0.0
        %2659 = vmatprep.subr.mxu0 0.0
        %2660 = vmatpush1.msra.mxu0 0.0
        %2661 = vmatprep.subr.mxu0 0.0
        %2662 = vmatpush1.msra.mxu0 0.0
        %2663 = vmatprep.subr.mxu0 0.0
        %2664 = vmatpush1.msra.mxu0 0.0
        %2665 = vmatprep.subr.mxu0 0.0
        %2666 = vmatpush1.msra.mxu0 0.0
        %2667 = vmatprep.mubr.f32.mxu0 0.0
        %2668 = vmatmul.mubr.f32.gmra.mrb[0].mxu0 %v2598
        %v2669 = vpop.f32.mrb[0].mxu0
        %v2670 = vadd.f32 0.0, %v2669
        %v2671 = vpop.f32.mrb[0].mxu0
        %2672 = vdwg.mxu0
        %v2674 = vsel %vm821, %v2129, 0
        %v2677 = vsel %vm2143, %v2139, 0
        %2679 = vmatprep.subr.mxu0 0.0
        %2680 = vmatpush1.msra.mxu0 %v2677
        %2681 = vmatprep.subr.mxu0 0.0
        %2682 = vmatpush1.msra.mxu0 0.0
        %2683 = vmatprep.subr.mxu0 0.0
        %2684 = vmatpush1.msra.mxu0 0.0
        %2685 = vmatprep.subr.mxu0 0.0
        %2686 = vmatpush1.msra.mxu0 0.0
        %2687 = vmatprep.subr.mxu0 0.0
        %2688 = vmatpush1.msra.mxu0 0.0
        %2689 = vmatprep.subr.mxu0 0.0
        %2690 = vmatpush1.msra.mxu0 0.0
        %2691 = vmatprep.subr.mxu0 0.0
        %2692 = vmatpush1.msra.mxu0 0.0
        %2693 = vmatprep.subr.mxu0 0.0
        %2694 = vmatpush1.msra.mxu0 0.0
        %2695 = vmatprep.subr.mxu0 0.0
        %2696 = vmatpush1.msra.mxu0 0.0
        %2697 = vmatprep.subr.mxu0 0.0
        %2698 = vmatpush1.msra.mxu0 0.0
        %2699 = vmatprep.subr.mxu0 0.0
        %2700 = vmatpush1.msra.mxu0 0.0
        %2701 = vmatprep.subr.mxu0 0.0
        %2702 = vmatpush1.msra.mxu0 0.0
        %2703 = vmatprep.subr.mxu0 0.0
        %2704 = vmatpush1.msra.mxu0 0.0
        %2705 = vmatprep.subr.mxu0 0.0
        %2706 = vmatpush1.msra.mxu0 0.0
        %2707 = vmatprep.subr.mxu0 0.0
        %2708 = vmatpush1.msra.mxu0 0.0
        %2709 = vmatprep.subr.mxu0 0.0
        %2710 = vmatpush1.msra.mxu0 0.0
        %2711 = vmatprep.subr.mxu0 0.0
        %2712 = vmatpush1.msra.mxu0 0.0
        %2713 = vmatprep.subr.mxu0 0.0
        %2714 = vmatpush1.msra.mxu0 0.0
        %2715 = vmatprep.subr.mxu0 0.0
        %2716 = vmatpush1.msra.mxu0 0.0
        %2717 = vmatprep.subr.mxu0 0.0
        %2718 = vmatpush1.msra.mxu0 0.0
        %2719 = vmatprep.subr.mxu0 0.0
        %2720 = vmatpush1.msra.mxu0 0.0
        %2721 = vmatprep.subr.mxu0 0.0
        %2722 = vmatpush1.msra.mxu0 0.0
        %2723 = vmatprep.subr.mxu0 0.0
        %2724 = vmatpush1.msra.mxu0 0.0
        %2725 = vmatprep.subr.mxu0 0.0
        %2726 = vmatpush1.msra.mxu0 0.0
        %2727 = vmatprep.subr.mxu0 0.0
        %2728 = vmatpush1.msra.mxu0 0.0
        %2729 = vmatprep.subr.mxu0 0.0
        %2730 = vmatpush1.msra.mxu0 0.0
        %2731 = vmatprep.subr.mxu0 0.0
        %2732 = vmatpush1.msra.mxu0 0.0
        %2733 = vmatprep.subr.mxu0 0.0
        %2734 = vmatpush1.msra.mxu0 0.0
        %2735 = vmatprep.subr.mxu0 0.0
        %2736 = vmatpush1.msra.mxu0 0.0
        %2737 = vmatprep.subr.mxu0 0.0
        %2738 = vmatpush1.msra.mxu0 0.0
        %2739 = vmatprep.subr.mxu0 0.0
        %2740 = vmatpush1.msra.mxu0 0.0
        %2741 = vmatprep.subr.mxu0 0.0
        %2742 = vmatpush1.msra.mxu0 0.0
        %2743 = vmatprep.mubr.f32.mxu0 0.0
        %2744 = vmatmul.mubr.f32.gmra.mrb[0].mxu0 %v2674
        %v2745 = vpop.f32.mrb[0].mxu0
        %v2746 = vadd.f32 0.0, %v2745
        %v2747 = vpop.f32.mrb[0].mxu0
        %2748 = vdwg.mxu0
        %v2749 = vsel %vm253, %v2214, 0.0
        %v2750 = vsel %vm253, %v2290, 0.0
        %v2751 = vadd.f32 %v2749, %v2750
        %v2752 = vsel %vm253, %v2366, 0.0
        %v2753 = vadd.f32 %v2751, %v2752
        %v2754 = vsel %vm253, %v2442, 0.0
        %v2755 = vadd.f32 %v2753, %v2754
        %v2756 = vsel %vm253, %v2518, 0.0
        %v2757 = vadd.f32 %v2755, %v2756
        %v2758 = vsel %vm253, %v2594, 0.0
        %v2759 = vadd.f32 %v2757, %v2758
        %v2760 = vsel %vm253, %v2670, 0.0
        %v2761 = vadd.f32 %v2759, %v2760
        %v2762 = vsel %vm253, %v2746, 0.0
        %v2763 = vadd.f32 %v2761, %v2762
        %v2764 = vld [vmem:[%s4] sm:$0x1]
        %v2766 = vlaneseq
        %v2767 = vshrl.u32 %v2766, 7
        %v2768 = vsub.s32 0, %v2767
        %v2769 = vrot.slane %v2764, %v2768
        %v2771 = vadd.f32 %v2763, %v2769
        %2772 = vst.msk [vmem:[%s215] sm:$0xff] %vm253, %v2771
        %s2773 = sand.u32 %s137, 1
        %s2774 = scalar_lea.sflag [#allocation3], %s2773
        %s2775 = sand.u32 %s137, 1
        %s2776 = smul.addr %s2775, 8
        %s2777 = scalar_lea.vmem [#allocation2], %s2776
        // Predicated region
        $region41: #{tpu_custom_call.1} parent=39 // pred_check
          %p2778 = pneg %p147
        $region42: #{tpu_custom_call.1} parent=39 // pred_check_branch
          %2780 = sbr.rel (%p2778) target = $region44
        $region43: #{tpu_custom_call.1} parent=39 // pred_region
          %s2782 = ssub.s32 128, 128
          %2783 = vsyncadd %s2774, %s2782
          %s2784 = smul.addr %s19, 128
          %s2785 = scalar_lea.hbm %s5, %s2784
          %s2787 = sshll.u32 %s2777, 4
          %s2788 = int_to_ptr.vmem [resolvable:$true] %s2787
          %2790 = dma.vmem_to_hbm [thread:$0]  %s2788, 128, %s2785, %s2774
        $region44: #{tpu_custom_call.1} parent=39 // pred_fallthru
          _
      $region40: #{tpu_custom_call.1} parent=5 // pred_fallthru
        _
      %p2791 = scmp.le.s32.totalorder 2, %s14
      // Predicated region
      $region45: #{tpu_custom_call.1} parent=5 // pred_check
        %p2792 = pneg %p2791
      $region46: #{tpu_custom_call.1} parent=5 // pred_check_branch
        %2794 = sbr.rel (%p2792) target = $region48
      $region47: #{tpu_custom_call.1} parent=5 // pred_region
        %s2795 = ssub.s32 %s14, 2
        // Predicated region
        $region49: #{tpu_custom_call.1} parent=47 // pred_check
          %p2796 = pneg %p153
        $region50: #{tpu_custom_call.1} parent=47 // pred_check_branch
          %2798 = sbr.rel (%p2796) target = $region52
        $region51: #{tpu_custom_call.1} parent=47 // pred_region
          %s2799 = sand.u32 %s138, 1
          %s2800 = scalar_lea.sflag [#allocation3], %s2799
          %s2801 = sand.u32 %s138, 1
          %s2802 = smul.addr %s2801, 8
          %s2803 = scalar_lea.vmem [#allocation2], %s2802
          %2804 = dma.done %s2800, 128
        $region52: #{tpu_custom_call.1} parent=47 // pred_fallthru
          _
      $region48: #{tpu_custom_call.1} parent=5 // pred_fallthru
        _
    $region6: #{tpu_custom_call.1} parent=1 // loop_footer
      %s18 = sadd.s32 1, %s14
    $region7: #{tpu_custom_call.1} parent=1 // loop_footer_branch
      %13 = sbr.rel target = $region3
    $region8: #{tpu_custom_call.1} parent=1 // loop_exit
      _
    %2805 = vsyncpa [#allocation3], 1
    %s2806 = scalar_lea.sflag [#allocation3], 1
    %2807 = vsyncpa %s2806, 1

</llo_original>
